<compile_context>
chip_gen: v6e
topology: v6e:2x2x1
jax: 0.10.0
libtpu: 0.0.40
codegen_flags: <defaults>
</compile_context>

<pallas_src>
from functools import partial

import jax
import jax.numpy as jnp
from jax.experimental import pallas as pl
from jax.experimental.pallas import tpu as pltpu


def _roll(x, shift, axis):
    """pltpu.roll with a non-negative (mod-reduced) static shift."""
    n = x.shape[axis]
    return pltpu.roll(x, shift=int(shift) % n, axis=axis)


def _conv_snn_kernel(x_ref, w_ref, scale_ref, shift_ref, wt_ref, o_ref,
                     *, T, H, W, OC, TK):
    TB = o_ref.shape[0]            # batches handled by this grid step
    NT = TB * T
    R = NT * H                     # rows fed to the spatial matmul
    KL = x_ref.shape[-1]           # KH * (W + 2*pad) * C

    # --- 3x3 spatial conv: ONE (R, KL) @ (KL, W*OC) bf16 matmul, f32 acc.
    xs = x_ref[...].reshape(R, KL)                    # pure view (H % 16 == 0)
    acc = jnp.dot(xs, w_ref[...], preferred_element_type=jnp.float32)

    # --- folded conv-bias + BatchNorm (running stats) + ReLU.
    #     Dropout is the eval-mode identity.
    y = jnp.maximum(acc * scale_ref[...] + shift_ref[...], 0.0)   # (R, W*OC) f32

    # --- width mean: roll+add tree on XLU/VPU (keeps MXU free, stays f32).
    r = y
    if W & (W - 1) == 0:
        s = W
        while s > 1:
            s //= 2
            r = r + _roll(r, -s * OC, axis=1)
    else:
        for w in range(1, W):
            r = r + _roll(y, -w * OC, axis=1)
    pw = r[:, :OC] * (1.0 / W)                                    # (R, OC)

    # --- height mean (sublane reduce).
    pooled = jnp.mean(pw.reshape(NT, H, OC), axis=1)              # (NT, OC)

    # --- temporal Conv1d (kernel TK, 'same' pad, no bias): shifted copies via
    #     sublane rolls + iota mask, ONE (NT, TK*OC) @ (TK*OC, OC) matmul.
    pad_t = TK // 2
    t_idx = jax.lax.broadcasted_iota(jnp.int32, (NT, OC), 0) % T
    parts = []
    for k in range(TK):
        s = k - pad_t                              # out[t] uses pooled[t + s]
        if s == 0:
            parts.append(pooled)
        else:
            shifted = _roll(pooled, -s, axis=0)
            ts = t_idx + s
            valid = jnp.logical_and(ts >= 0, ts <= T - 1)
            parts.append(jnp.where(valid, shifted, 0.0))
    pcat = jnp.concatenate(parts, axis=-1)                        # (NT, TK*OC)
    out = jnp.dot(pcat, wt_ref[...], preferred_element_type=jnp.float32)

    # TODO(synk): output keeps OC=32 lanes (masked store); a lane-dense
    # (TB, T*OC) store would need a sublane->lane reshape that Mosaic may not
    # lower cleanly — output is tiny, so the masked store is accepted.
    o_ref[...] = out.reshape(TB, T, OC).astype(o_ref.dtype)


def conv_snn_block(x, conv_w, conv_b, bn_gamma, bn_beta, bn_mean, bn_var,
                   temporal_w, *, eps=1e-5, block_b=None,
                   compute_dtype=jnp.bfloat16):
    """Inference forward of ConvSNNBlock.

    x:           (B, T, C, H, W) float32
    conv_w:      (OC, C, KH, KW)  Conv2d weight (stride 1, 'same' padding)
    conv_b:      (OC,)            Conv2d bias
    bn_*:        (OC,)            BatchNorm2d affine params / running stats
    temporal_w:  (OC, OC, TK)     Conv1d weight (padding TK//2, no bias)
    returns:     (B, T, OC) float32
    """
    B, T, C, H, W = x.shape
    OC, Cw, KH, KW = conv_w.shape
    TK = temporal_w.shape[2]
    assert Cw == C and KH % 2 == 1 and KW % 2 == 1 and TK % 2 == 1
    # TODO(synk): only stride=1 / 'same' padding and the eval-mode BatchNorm
    # (running stats) + Dropout(identity) path are implemented.
    ph, pw_ = KH // 2, KW // 2
    Hp, Wp = H + 2 * ph, W + 2 * pw_
    N = B * T
    L = Wp * C
    KL = KH * L

    # ---- layout plumbing (cheap XLA ops) ------------------------------------
    # NHWC, zero-padded, width*channels merged on lanes, then the KH kernel
    # rows unrolled onto the lane axis so the kernel runs one K=KL matmul.
    x_nhwc = jnp.transpose(x, (0, 1, 3, 4, 2))
    x_pad = jnp.pad(x_nhwc, ((0, 0), (0, 0), (ph, ph), (pw_, pw_), (0, 0)))
    x_m = x_pad.reshape(N, Hp, L)
    x_exp = jnp.concatenate([x_m[:, kh:kh + H, :] for kh in range(KH)],
                            axis=-1).astype(compute_dtype)       # (N, H, KL)

    # Banded weight: w_cat[kh*L + j*C + c, w*OC + oc] = conv_w[oc, c, kh, j-w].
    w_t = jnp.transpose(conv_w, (2, 3, 1, 0)).astype(jnp.float32)  # (KH,KW,C,OC)
    bands = []
    for kh in range(KH):
        band = jnp.zeros((Wp, C, W, OC), jnp.float32)
        for kw in range(KW):
            sel = jnp.eye(Wp, W, k=-kw, dtype=jnp.float32)         # sel[w+kw,w]=1
            band = band + jnp.einsum("pw,co->pcwo", sel, w_t[kh, kw])
        bands.append(band.reshape(L, W * OC))
    w_cat = jnp.concatenate(bands, axis=0).astype(compute_dtype)   # (KL, W*OC)

    # Fold conv bias + BatchNorm(running stats) into one scale/shift, tiled
    # across the W lane groups of the banded intermediate.
    bn_scale = (bn_gamma / jnp.sqrt(bn_var + eps)).astype(jnp.float32)
    bn_shift = (bn_beta + (conv_b - bn_mean) * bn_scale).astype(jnp.float32)
    scale_b = jnp.tile(bn_scale, W).reshape(1, W * OC)
    shift_b = jnp.tile(bn_shift, W).reshape(1, W * OC)

    # Temporal conv weight concatenated over taps: (TK*OC, OC), f32.
    wt_cat = jnp.transpose(temporal_w, (2, 1, 0)).reshape(TK * OC, OC)
    wt_cat = wt_cat.astype(jnp.float32)

    # ---- batch tile: fill VMEM, keep >=2 grid steps (v7x 2-TC), TB | B ------
    rnd = lambda n, m: -(-n // m) * m
    if block_b is None:
        try:
            vmem_cap = int(pltpu.get_tpu_info().vmem_capacity_bytes)
        except Exception:
            vmem_cap = 64 * 1024 * 1024                 # v7x physical (smallest)
        budget = min(vmem_cap // 3, 24 * 1024 * 1024)   # headroom on v7x 64 MiB
        per_b = (2 * T * rnd(H, 16) * rnd(KL, 128) * 2      # bf16 x slab, dbl-buf
                 + 3 * T * H * rnd(W * OC, 128) * 4)        # live f32 intermediates
        const = 2 * rnd(KL, 16) * rnd(W * OC, 128) * 2 + (1 << 20)
        cap = max(1, int((budget - const) // max(per_b, 1)))
        cap = min(cap, B)
        if B >= 2:
            cap = min(cap, B // 2)                      # both v7x TCs get work
    else:
        cap = max(1, min(B, int(block_b)))
    TB = 1
    for d in range(cap, 0, -1):
        if B % d == 0:
            TB = d
            break
    grid = (B // TB,)

    flops = 2 * N * H * KL * (W * OC) + 2 * N * (TK * OC) * OC
    bytes_accessed = (x_exp.size * 2 + w_cat.size * 2
                      + (scale_b.size + shift_b.size + wt_cat.size) * 4
                      + B * T * OC * 4)

    kernel = partial(_conv_snn_kernel, T=T, H=H, W=W, OC=OC, TK=TK)
    out = pl.pallas_call(
        kernel,
        out_shape=jax.ShapeDtypeStruct((B, T, OC), jnp.float32),
        grid=grid,
        in_specs=[
            pl.BlockSpec((TB * T, H, KL), lambda b: (b, 0, 0)),   # x (im2row-KH)
            pl.BlockSpec((KL, W * OC), lambda b: (0, 0)),         # banded weight
            pl.BlockSpec((1, W * OC), lambda b: (0, 0)),          # BN scale
            pl.BlockSpec((1, W * OC), lambda b: (0, 0)),          # BN shift
            pl.BlockSpec((TK * OC, OC), lambda b: (0, 0)),        # temporal W
        ],
        out_specs=pl.BlockSpec((TB, T, OC), lambda b: (b, 0, 0)),
        compiler_params=pltpu.CompilerParams(
            dimension_semantics=("parallel",),
            vmem_limit_bytes=32 * 1024 * 1024),
        cost_estimate=pl.CostEstimate(flops=int(flops), transcendentals=0,
                                      bytes_accessed=int(bytes_accessed)),
    )(x_exp, w_cat, scale_b, shift_b, wt_cat)
    return out


def _reference(x, conv_w, conv_b, gamma, beta, mean, var, eps, t_w):
    """Pure-JAX (XLA) reference of the eval-mode forward pass."""
    B, T, C, H, W = x.shape
    tk = t_w.shape[2]
    xs = x.reshape(B * T, C, H, W)
    y = jax.lax.conv_general_dilated(
        xs, conv_w, window_strides=(1, 1), padding=((1, 1), (1, 1)),
        dimension_numbers=("NCHW", "OIHW", "NCHW"),
        precision=jax.lax.Precision.HIGHEST)
    y = y + conv_b[None, :, None, None]
    inv = (gamma / jnp.sqrt(var + eps))[None, :, None, None]
    y = (y - mean[None, :, None, None]) * inv + beta[None, :, None, None]
    y = jnp.maximum(y, 0.0)                          # dropout eval = identity
    pooled = y.reshape(B, T, -1, H, W).mean(axis=(3, 4))        # (B, T, OC)
    xt = jnp.transpose(pooled, (0, 2, 1))                       # (B, OC, T)
    yt = jax.lax.conv_general_dilated(
        xt, t_w, window_strides=(1,), padding=((tk // 2, tk // 2),),
        dimension_numbers=("NCH", "OIH", "NCH"),
        precision=jax.lax.Precision.HIGHEST)
    return jnp.transpose(yt, (0, 2, 1))                         # (B, T, OC)


if __name__ == "__main__":
    B, T, C, H, W, OC = 2, 8, 4, 16, 16, 32

    key = jax.random.PRNGKey(0)
    kx, kw, kb, kg, kbt, km, kv, kt = jax.random.split(key, 8)

    x = jax.random.normal(kx, (B, T, C, H, W), dtype=jnp.float32)
    bound = 1.0 / ((C * 3 * 3) ** 0.5)
    conv_w = jax.random.uniform(kw, (OC, C, 3, 3), minval=-bound, maxval=bound,
                                dtype=jnp.float32)
    conv_b = jax.random.uniform(kb, (OC,), minval=-bound, maxval=bound,
                                dtype=jnp.float32)
    bn_gamma = 1.0 + 0.1 * jax.random.normal(kg, (OC,), dtype=jnp.float32)
    bn_beta = 0.1 * jax.random.normal(kbt, (OC,), dtype=jnp.float32)
    bn_mean = 0.1 * jax.random.normal(km, (OC,), dtype=jnp.float32)
    bn_var = jax.random.uniform(kv, (OC,), minval=0.5, maxval=1.5,
                                dtype=jnp.float32)
    tbound = 1.0 / ((OC * 3) ** 0.5)
    temporal_w = jax.random.uniform(kt, (OC, OC, 3), minval=-tbound,
                                    maxval=tbound, dtype=jnp.float32)

    # Quantize the bf16-cast tensors up front so kernel and reference see the
    # exact same values (the kernel's internal bf16 cast is then lossless).
    x_q = x.astype(jnp.bfloat16).astype(jnp.float32)
    conv_w_q = conv_w.astype(jnp.bfloat16).astype(jnp.float32)

    out = conv_snn_block(x_q, conv_w_q, conv_b, bn_gamma, bn_beta, bn_mean,
                         bn_var, temporal_w)
    out = jax.block_until_ready(out)

    ref = _reference(x_q, conv_w_q, conv_b, bn_gamma, bn_beta, bn_mean, bn_var,
                     1e-5, temporal_w)

    assert out.shape == (B, T, OC)
    max_err = float(jnp.max(jnp.abs(out - ref)))
    assert jnp.allclose(out, ref, atol=1e-3, rtol=1e-3), max_err

    print("KERNEL_OK")
</pallas_src>

<mosaic_0001>
module attributes {stable_mosaic.version = 11 : i64} {
  func.func @_conv_snn_kernel(%arg0: i32, %arg1: memref<8x16x216xbf16, #tpu.memory_space<vmem>>, %arg2: memref<216x512xbf16, #tpu.memory_space<vmem>>, %arg3: memref<1x512xf32, #tpu.memory_space<vmem>>, %arg4: memref<1x512xf32, #tpu.memory_space<vmem>>, %arg5: memref<96x32xf32, #tpu.memory_space<vmem>>, %arg6: memref<1x8x32xf32, #tpu.memory_space<vmem>>) attributes {dimension_semantics = [#tpu.dimension_semantics<parallel>], iteration_bounds = array<i64: 2>, scalar_prefetch = 0 : i64, scratch_operands = 0 : i64, tpu.core_type = #tpu.core_type<tc>, window_params = [{transform_indices = @transform_0, window_bounds = array<i64: 8, 16, 216>}, {pipeline_mode = #tpu.pipeline_mode<synchronous>, transform_indices = @transform_1, window_bounds = array<i64: 216, 512>}, {pipeline_mode = #tpu.pipeline_mode<synchronous>, transform_indices = @transform_2, window_bounds = array<i64: 1, 512>}, {pipeline_mode = #tpu.pipeline_mode<synchronous>, transform_indices = @transform_3, window_bounds = array<i64: 1, 512>}, {pipeline_mode = #tpu.pipeline_mode<synchronous>, transform_indices = @transform_4, window_bounds = array<i64: 96, 32>}, {transform_indices = @transform_5, window_bounds = array<i64: 1, 8, 32>}]} {
    %c0 = arith.constant 0 : index
    %c0_0 = arith.constant 0 : index
    %c0_1 = arith.constant 0 : index
    %0 = vector.load %arg1[%c0, %c0_0, %c0_1] : memref<8x16x216xbf16, #tpu.memory_space<vmem>>, vector<8x16x216xbf16>
    %1 = vector.shape_cast %0 : vector<8x16x216xbf16> to vector<128x216xbf16>
    %c0_2 = arith.constant 0 : index
    %c0_3 = arith.constant 0 : index
    %2 = vector.load %arg2[%c0_2, %c0_3] : memref<216x512xbf16, #tpu.memory_space<vmem>>, vector<216x512xbf16>
    %cst = arith.constant dense<0.000000e+00> : vector<128x512xf32>
    %3 = tpu.matmul %1, %2, %cst {dimension_numbers = #tpu.dot_dimension_numbers<[1], [0], [0], [1], [0, 0, 1, 1], [], []>} : vector<128x216xbf16>, vector<216x512xbf16>, vector<128x512xf32> -> vector<128x512xf32>
    %c0_4 = arith.constant 0 : index
    %c0_5 = arith.constant 0 : index
    %4 = vector.load %arg3[%c0_4, %c0_5] : memref<1x512xf32, #tpu.memory_space<vmem>>, vector<1x512xf32>
    %5 = vector.broadcast %4 : vector<1x512xf32> to vector<128x512xf32>
    %6 = arith.mulf %3, %5 : vector<128x512xf32>
    %c0_6 = arith.constant 0 : index
    %c0_7 = arith.constant 0 : index
    %7 = vector.load %arg4[%c0_6, %c0_7] : memref<1x512xf32, #tpu.memory_space<vmem>>, vector<1x512xf32>
    %8 = vector.broadcast %7 : vector<1x512xf32> to vector<128x512xf32>
    %9 = arith.addf %6, %8 : vector<128x512xf32>
    %cst_8 = arith.constant 0.000000e+00 : f32
    %10 = vector.broadcast %cst_8 : f32 to vector<128x512xf32>
    %11 = arith.maximumf %9, %10 : vector<128x512xf32>
    %c256_i32 = arith.constant 256 : i32
    %12 = tpu.dynamic_rotate %11 by %c256_i32 dim 1 : vector<128x512xf32>, i32 -> vector<128x512xf32>
    %13 = arith.addf %11, %12 : vector<128x512xf32>
    %c384_i32 = arith.constant 384 : i32
    %14 = tpu.dynamic_rotate %13 by %c384_i32 dim 1 : vector<128x512xf32>, i32 -> vector<128x512xf32>
    %15 = arith.addf %13, %14 : vector<128x512xf32>
    %c448_i32 = arith.constant 448 : i32
    %16 = tpu.dynamic_rotate %15 by %c448_i32 dim 1 : vector<128x512xf32>, i32 -> vector<128x512xf32>
    %17 = arith.addf %15, %16 : vector<128x512xf32>
    %c480_i32 = arith.constant 480 : i32
    %18 = tpu.dynamic_rotate %17 by %c480_i32 dim 1 : vector<128x512xf32>, i32 -> vector<128x512xf32>
    %19 = arith.addf %17, %18 : vector<128x512xf32>
    %20 = vector.extract_strided_slice %19 {offsets = [0, 0], sizes = [128, 32], strides = [1, 1]} : vector<128x512xf32> to vector<128x32xf32>
    %cst_9 = arith.constant 6.250000e-02 : f32
    %21 = vector.broadcast %cst_9 : f32 to vector<128x32xf32>
    %22 = arith.mulf %20, %21 : vector<128x32xf32>
    %23 = vector.shape_cast %22 : vector<128x32xf32> to vector<8x16x32xf32>
    %cst_10 = arith.constant dense<0.000000e+00> : vector<8x32xf32>
    %24 = vector.multi_reduction <add>, %23, %cst_10 [1] : vector<8x16x32xf32> to vector<8x32xf32>
    %cst_11 = arith.constant 1.600000e+01 : f32
    %25 = vector.broadcast %cst_11 : f32 to vector<8x32xf32>
    %26 = arith.divf %24, %25 : vector<8x32xf32>
    %27 = tpu.iota {dimensions = array<i32: 0>} : vector<8x32xi32>
    %c8_i32 = arith.constant 8 : i32
    %c0_i32 = arith.constant 0 : i32
    %28 = arith.cmpi eq, %c8_i32, %c0_i32 : i32
    %c1_i32 = arith.constant 1 : i32
    %29 = arith.select %28, %c1_i32, %c8_i32 : i32
    %30 = vector.broadcast %29 : i32 to vector<8x32xi32>
    %31 = arith.remsi %27, %30 : vector<8x32xi32>
    %c0_i32_12 = arith.constant 0 : i32
    %32 = vector.broadcast %c0_i32_12 : i32 to vector<8x32xi32>
    %33 = arith.cmpi ne, %31, %32 : vector<8x32xi32>
    %c0_i32_13 = arith.constant 0 : i32
    %34 = vector.broadcast %c0_i32_13 : i32 to vector<8x32xi32>
    %35 = arith.cmpi slt, %31, %34 : vector<8x32xi32>
    %c0_i32_14 = arith.constant 0 : i32
    %36 = arith.cmpi slt, %29, %c0_i32_14 : i32
    %37 = vector.broadcast %36 : i1 to vector<8x32xi1>
    %38 = vector.broadcast %37 : vector<8x32xi1> to vector<8x32xi1>
    %39 = arith.xori %35, %38 : vector<8x32xi1>
    %40 = arith.andi %39, %33 : vector<8x32xi1>
    %41 = vector.broadcast %29 : i32 to vector<8x32xi32>
    %42 = arith.addi %31, %41 : vector<8x32xi32>
    %43 = arith.select %40, %42, %31 : vector<8x32xi1>, vector<8x32xi32>
    %c1_i32_15 = arith.constant 1 : i32
    %44 = tpu.dynamic_rotate %26 by %c1_i32_15 dim 0 : vector<8x32xf32>, i32 -> vector<8x32xf32>
    %c-1_i32 = arith.constant -1 : i32
    %45 = vector.broadcast %c-1_i32 : i32 to vector<8x32xi32>
    %46 = arith.addi %43, %45 : vector<8x32xi32>
    %c0_i32_16 = arith.constant 0 : i32
    %47 = vector.broadcast %c0_i32_16 : i32 to vector<8x32xi32>
    %48 = arith.cmpi sge, %46, %47 : vector<8x32xi32>
    %c7_i32 = arith.constant 7 : i32
    %49 = vector.broadcast %c7_i32 : i32 to vector<8x32xi32>
    %50 = arith.cmpi sle, %46, %49 : vector<8x32xi32>
    %51 = arith.andi %48, %50 : vector<8x32xi1>
    %cst_17 = arith.constant 0.000000e+00 : f32
    %52 = vector.broadcast %cst_17 : f32 to vector<8x32xf32>
    %53 = arith.select %51, %44, %52 : vector<8x32xi1>, vector<8x32xf32>
    %c7_i32_18 = arith.constant 7 : i32
    %54 = tpu.dynamic_rotate %26 by %c7_i32_18 dim 0 : vector<8x32xf32>, i32 -> vector<8x32xf32>
    %c1_i32_19 = arith.constant 1 : i32
    %55 = vector.broadcast %c1_i32_19 : i32 to vector<8x32xi32>
    %56 = arith.addi %43, %55 : vector<8x32xi32>
    %c0_i32_20 = arith.constant 0 : i32
    %57 = vector.broadcast %c0_i32_20 : i32 to vector<8x32xi32>
    %58 = arith.cmpi sge, %56, %57 : vector<8x32xi32>
    %c7_i32_21 = arith.constant 7 : i32
    %59 = vector.broadcast %c7_i32_21 : i32 to vector<8x32xi32>
    %60 = arith.cmpi sle, %56, %59 : vector<8x32xi32>
    %61 = arith.andi %58, %60 : vector<8x32xi1>
    %cst_22 = arith.constant 0.000000e+00 : f32
    %62 = vector.broadcast %cst_22 : f32 to vector<8x32xf32>
    %63 = arith.select %61, %54, %62 : vector<8x32xi1>, vector<8x32xf32>
    %64 = tpu.concatenate %53, %26, %63 in 1 : vector<8x32xf32>, vector<8x32xf32>, vector<8x32xf32> -> vector<8x96xf32>
    %c0_23 = arith.constant 0 : index
    %c0_24 = arith.constant 0 : index
    %65 = vector.load %arg5[%c0_23, %c0_24] : memref<96x32xf32, #tpu.memory_space<vmem>>, vector<96x32xf32>
    %cst_25 = arith.constant dense<0.000000e+00> : vector<8x32xf32>
    %66 = tpu.matmul %64, %65, %cst_25 {dimension_numbers = #tpu.dot_dimension_numbers<[1], [0], [0], [1], [0, 0, 1, 1], [], []>} : vector<8x96xf32>, vector<96x32xf32>, vector<8x32xf32> -> vector<8x32xf32>
    %67 = vector.shape_cast %66 : vector<8x32xf32> to vector<1x8x32xf32>
    %c0_26 = arith.constant 0 : index
    %c0_27 = arith.constant 0 : index
    %c0_28 = arith.constant 0 : index
    %68 = vector.load %arg6[%c0_26, %c0_27, %c0_28] : memref<1x8x32xf32, #tpu.memory_space<vmem>>, vector<1x8x32xf32>
    tpu.vector_store %arg6[%c0_26, %c0_27, %c0_28], %67 {strides = array<i32>} : memref<1x8x32xf32, #tpu.memory_space<vmem>>, vector<1x8x32xf32>,
    return
  }
  func.func @transform_0(%arg0: i32) -> (i32, i32, i32) {
    %c0_i32 = arith.constant 0 : i32
    %c0_i32_0 = arith.constant 0 : i32
    %c0_i32_1 = arith.constant 0 : i32
    return %arg0, %c0_i32, %c0_i32_0 : i32, i32, i32
  }
  func.func @transform_1(%arg0: i32) -> (i32, i32) {
    %c0_i32 = arith.constant 0 : i32
    %c0_i32_0 = arith.constant 0 : i32
    %c0_i32_1 = arith.constant 0 : i32
    return %c0_i32, %c0_i32_0 : i32, i32
  }
  func.func @transform_2(%arg0: i32) -> (i32, i32) {
    %c0_i32 = arith.constant 0 : i32
    %c0_i32_0 = arith.constant 0 : i32
    %c0_i32_1 = arith.constant 0 : i32
    return %c0_i32, %c0_i32_0 : i32, i32
  }
  func.func @transform_3(%arg0: i32) -> (i32, i32) {
    %c0_i32 = arith.constant 0 : i32
    %c0_i32_0 = arith.constant 0 : i32
    %c0_i32_1 = arith.constant 0 : i32
    return %c0_i32, %c0_i32_0 : i32, i32
  }
  func.func @transform_4(%arg0: i32) -> (i32, i32) {
    %c0_i32 = arith.constant 0 : i32
    %c0_i32_0 = arith.constant 0 : i32
    %c0_i32_1 = arith.constant 0 : i32
    return %c0_i32, %c0_i32_0 : i32, i32
  }
  func.func @transform_5(%arg0: i32) -> (i32, i32, i32) {
    %c0_i32 = arith.constant 0 : i32
    %c0_i32_0 = arith.constant 0 : i32
    %c0_i32_1 = arith.constant 0 : i32
    return %arg0, %c0_i32, %c0_i32_0 : i32, i32, i32
  }
}

</mosaic_0001>

<llo_original>
// kernel: tpu_custom_call.1
$region0: #{tpu_custom_call.1}
  #allocation0 [shape = 'u32[]', space=smem, size = 0x4, offset = 0x4, fixed_abs, tag = 'smem constant byte address 0x4 - core index']
  #allocation1 [shape = 'u32[144,128]{1,0:T(1,128)}', space=vmem, size = 0x12000, scoped, tag = 'internal scratch']
  %s0 = inlined_call_operand.hbm [shape: bf16[16,16,216], index: 0, kind: input, shape index: {}]
  %s1 = inlined_call_operand.hbm [shape: bf16[216,512], index: 1, kind: input, shape index: {}]
  %s2 = inlined_call_operand.vmem [shape: f32[1,512], index: 2, kind: input, shape index: {}]
  %s3 = inlined_call_operand.vmem [shape: f32[1,512], index: 3, kind: input, shape index: {}]
  %s4 = inlined_call_operand.vmem [shape: f32[96,32], index: 4, kind: input, shape index: {}]
  %s5 = inlined_call_operand.hbm [shape: f32[2,8,32], index: 5, kind: output, shape index: {}]
  %s6 = sld [smem:[#allocation0]]
  $region61: #{tpu_custom_call.1} parent=0
    _
  %s8 = ssub.s32 1, %s6
  %s9 = scalar_select 0, %s8, %s6
  $region1: #{tpu_custom_call.1} parent=0
    #allocation2 [shape = 'u8[131072]{0}', space=vmem, size = 0x20000, scoped, tag = 'input window, operand 0']
    #allocation3 [shape = 's32[2]{0}', space=sflag, size = 0x8, scoped, tag = 'scoped memory for tpu_custom_call.1']
    #allocation4 [shape = 's32[2]{0}', space=sflag, size = 0x8, scoped, tag = 'scoped memory for tpu_custom_call.1']
    #allocation5 [shape = 'u8[221184]{0}', space=vmem, size = 0x36000, scoped, tag = 'input window, operand 1, single buffered']
    #allocation6 [shape = 's32[1]{0}', space=sflag, size = 0x4, scoped, tag = 'scoped memory for tpu_custom_call.1']
    #allocation7 [shape = 'u8[8192]{0}', space=vmem, size = 0x2000, scoped, tag = 'output window, operand 0']
    %10 = vsyncpa [#allocation3], 0
    %s11 = scalar_lea.sflag [#allocation3], 1
    %12 = vsyncpa %s11, 0
    %13 = vsyncpa [#allocation6], 0
    %14 = vsyncpa [#allocation4], 0
    %s15 = scalar_lea.sflag [#allocation4], 1
    %16 = vsyncpa %s15, 0
    loop: start=0, step=1, limit=4
    $region2: #{tpu_custom_call.1} parent=1 // loop_pre_header
      _
    $region3: #{tpu_custom_call.1} parent=1 // loop_header
      %s18 = sphi 0, %s22
      %p19 = scmp.ge.s32.totalorder %s18, 4
      %s28 = sphi 0, %s30
      %s31 = sphi 0, %s28
      %s32 = sphi 0, %s31
      %s48 = sphi 0, %s32
      %s52 = sphi 0, %s52
      %s54 = sphi 0, %s52
      %s55 = sphi 0, %s54
      %s69 = sphi 0, %s55
      %s73 = sphi 0, %s73
      %s75 = sphi 0, %s73
      %s76 = sphi 0, %s75
      %s90 = sphi 0, %s76
      %s94 = sphi 0, %s94
      %s96 = sphi 0, %s94
      %s97 = sphi 0, %s96
      %s111 = sphi 0, %s97
      %s115 = sphi 0, %s115
      %s117 = sphi 0, %s115
      %s118 = sphi 0, %s117
      %s132 = sphi 0, %s118
      %s138 = sphi 0, %s140
      %s141 = sphi 0, %s138
      %s142 = sphi 0, %s141
      %s158 = sphi 0, %s142
    $region4: #{tpu_custom_call.1} parent=1 // loop_header_branch
      %21 = sbr.rel (%p19) target = $region8
    $region5: #{tpu_custom_call.1} parent=1 // loop_body
      %s23 = ssub.s32 %s18, 1
      %s24 = ssub.s32 %s18, 2
      %s25 = sadd.s32 %s18, 1
      %s26 = ssub.s32 %s18, %s25
      %p27 = scmp.eq.s32.totalorder %s26, 0
      %s29 = sadd.s32 %s28, 1
      %s30 = scalar_select %p27, %s28, %s29
      %p33 = pneg %p27
      %p34 = scmp.eq.s32.totalorder %s18, 1
      %p35 = por %p33, %p34
      %p36 = scmp.ne.s32.totalorder %s28, %s31
      %p37 = scmp.eq.s32.totalorder %s18, 0
      %p38 = por %p36, %p37
      %p39 = scmp.ne.s32.totalorder %s28, %s31
      %p40 = scmp.eq.s32.totalorder %s23, 1
      %p41 = por %p39, %p40
      %p42 = scmp.ne.s32.totalorder %s31, %s32
      %p43 = scmp.eq.s32.totalorder %s23, 0
      %p44 = por %p42, %p43
      %p45 = scmp.ne.s32.totalorder %s31, %s32
      %p46 = scmp.eq.s32.totalorder %s24, 1
      %p47 = por %p45, %p46
      %p49 = scmp.ne.s32.totalorder %s32, %s48
      %p50 = scmp.eq.s32.totalorder %s24, 0
      %p51 = por %p49, %p50
      %s53 = sadd.s32 %s52, 1
      %p56 = scmp.eq.s32.totalorder %s18, 1
      %p57 = scmp.ne.s32.totalorder %s52, %s54
      %p58 = scmp.eq.s32.totalorder %s18, 0
      %p59 = por %p57, %p58
      %p60 = scmp.ne.s32.totalorder %s52, %s54
      %p61 = scmp.eq.s32.totalorder %s23, 1
      %p62 = por %p60, %p61
      %p63 = scmp.ne.s32.totalorder %s54, %s55
      %p64 = scmp.eq.s32.totalorder %s23, 0
      %p65 = por %p63, %p64
      %p66 = scmp.ne.s32.totalorder %s54, %s55
      %p67 = scmp.eq.s32.totalorder %s24, 1
      %p68 = por %p66, %p67
      %p70 = scmp.ne.s32.totalorder %s55, %s69
      %p71 = scmp.eq.s32.totalorder %s24, 0
      %p72 = por %p70, %p71
      %s74 = sadd.s32 %s73, 1
      %p77 = scmp.eq.s32.totalorder %s18, 1
      %p78 = scmp.ne.s32.totalorder %s73, %s75
      %p79 = scmp.eq.s32.totalorder %s18, 0
      %p80 = por %p78, %p79
      %p81 = scmp.ne.s32.totalorder %s73, %s75
      %p82 = scmp.eq.s32.totalorder %s23, 1
      %p83 = por %p81, %p82
      %p84 = scmp.ne.s32.totalorder %s75, %s76
      %p85 = scmp.eq.s32.totalorder %s23, 0
      %p86 = por %p84, %p85
      %p87 = scmp.ne.s32.totalorder %s75, %s76
      %p88 = scmp.eq.s32.totalorder %s24, 1
      %p89 = por %p87, %p88
      %p91 = scmp.ne.s32.totalorder %s76, %s90
      %p92 = scmp.eq.s32.totalorder %s24, 0
      %p93 = por %p91, %p92
      %s95 = sadd.s32 %s94, 1
      %p98 = scmp.eq.s32.totalorder %s18, 1
      %p99 = scmp.ne.s32.totalorder %s94, %s96
      %p100 = scmp.eq.s32.totalorder %s18, 0
      %p101 = por %p99, %p100
      %p102 = scmp.ne.s32.totalorder %s94, %s96
      %p103 = scmp.eq.s32.totalorder %s23, 1
      %p104 = por %p102, %p103
      %p105 = scmp.ne.s32.totalorder %s96, %s97
      %p106 = scmp.eq.s32.totalorder %s23, 0
      %p107 = por %p105, %p106
      %p108 = scmp.ne.s32.totalorder %s96, %s97
      %p109 = scmp.eq.s32.totalorder %s24, 1
      %p110 = por %p108, %p109
      %p112 = scmp.ne.s32.totalorder %s97, %s111
      %p113 = scmp.eq.s32.totalorder %s24, 0
      %p114 = por %p112, %p113
      %s116 = sadd.s32 %s115, 1
      %p119 = scmp.eq.s32.totalorder %s18, 1
      %p120 = scmp.ne.s32.totalorder %s115, %s117
      %p121 = scmp.eq.s32.totalorder %s18, 0
      %p122 = por %p120, %p121
      %p123 = scmp.ne.s32.totalorder %s115, %s117
      %p124 = scmp.eq.s32.totalorder %s23, 1
      %p125 = por %p123, %p124
      %p126 = scmp.ne.s32.totalorder %s117, %s118
      %p127 = scmp.eq.s32.totalorder %s23, 0
      %p128 = por %p126, %p127
      %p129 = scmp.ne.s32.totalorder %s117, %s118
      %p130 = scmp.eq.s32.totalorder %s24, 1
      %p131 = por %p129, %p130
      %p133 = scmp.ne.s32.totalorder %s118, %s132
      %p134 = scmp.eq.s32.totalorder %s24, 0
      %p135 = por %p133, %p134
      %s136 = ssub.s32 %s18, %s25
      %p137 = scmp.eq.s32.totalorder %s136, 0
      %s139 = sadd.s32 %s138, 1
      %s140 = scalar_select %p137, %s138, %s139
      %p143 = pneg %p137
      %p144 = scmp.eq.s32.totalorder %s18, 1
      %p145 = por %p143, %p144
      %p146 = scmp.ne.s32.totalorder %s138, %s141
      %p147 = scmp.eq.s32.totalorder %s18, 0
      %p148 = por %p146, %p147
      %p149 = scmp.ne.s32.totalorder %s138, %s141
      %p150 = scmp.eq.s32.totalorder %s23, 1
      %p151 = por %p149, %p150
      %p152 = scmp.ne.s32.totalorder %s141, %s142
      %p153 = scmp.eq.s32.totalorder %s23, 0
      %p154 = por %p152, %p153
      %p155 = scmp.ne.s32.totalorder %s141, %s142
      %p156 = scmp.eq.s32.totalorder %s24, 1
      %p157 = por %p155, %p156
      %p159 = scmp.ne.s32.totalorder %s142, %s158
      %p160 = scmp.eq.s32.totalorder %s24, 0
      %p161 = por %p159, %p160
      %p162 = scmp.le.s32.totalorder 1, %s18
      %p163 = scmp.lt.s32.totalorder %s18, 3
      %p164 = pnand %p162, %p163
      %p165 = pneg %p164
      // Predicated region
      $region9: #{tpu_custom_call.1} parent=5 // pred_check
        _
      $region10: #{tpu_custom_call.1} parent=5 // pred_check_branch
        %167 = sbr.rel (%p164) target = $region12
      $region11: #{tpu_custom_call.1} parent=5 // pred_region
        %s168 = ssub.s32 %s18, 1
        // Predicated region
        $region13: #{tpu_custom_call.1} parent=11 // pred_check
          %p169 = pneg %p65
        $region14: #{tpu_custom_call.1} parent=11 // pred_check_branch
          %171 = sbr.rel (%p169) target = $region16
        $region15: #{tpu_custom_call.1} parent=11 // pred_region
          %s173 = ssub.s32 6912, 6912
          %174 = vsyncadd [#allocation6], %s173
          %s175 = sshll.u32 [#allocation5], 4
          %s176 = int_to_ptr.vmem [resolvable:$true] %s175
          %181 = dma.hbm_to_vmem [thread:$0]  %s1, 6912, %s176, [#allocation6], 256, 256, 16
        $region16: #{tpu_custom_call.1} parent=11 // pred_fallthru
          _
        // Predicated region
        $region17: #{tpu_custom_call.1} parent=11 // pred_check
          %p182 = pneg %p86
        $region18: #{tpu_custom_call.1} parent=11 // pred_check_branch
          %184 = sbr.rel (%p182) target = $region20
        $region19: #{tpu_custom_call.1} parent=11 // pred_region
          _
        $region20: #{tpu_custom_call.1} parent=11 // pred_fallthru
          _
        // Predicated region
        $region21: #{tpu_custom_call.1} parent=11 // pred_check
          %p185 = pneg %p107
        $region22: #{tpu_custom_call.1} parent=11 // pred_check_branch
          %187 = sbr.rel (%p185) target = $region24
        $region23: #{tpu_custom_call.1} parent=11 // pred_region
          _
        $region24: #{tpu_custom_call.1} parent=11 // pred_fallthru
          _
        // Predicated region
        $region25: #{tpu_custom_call.1} parent=11 // pred_check
          %p188 = pneg %p128
        $region26: #{tpu_custom_call.1} parent=11 // pred_check_branch
          %190 = sbr.rel (%p188) target = $region28
        $region27: #{tpu_custom_call.1} parent=11 // pred_region
          _
        $region28: #{tpu_custom_call.1} parent=11 // pred_fallthru
          _
      $region12: #{tpu_custom_call.1} parent=5 // pred_fallthru
        _
      %p191 = scmp.lt.s32.totalorder %s18, 2
      // Predicated region
      $region29: #{tpu_custom_call.1} parent=5 // pred_check
        %p192 = pneg %p191
      $region30: #{tpu_custom_call.1} parent=5 // pred_check_branch
        %194 = sbr.rel (%p192) target = $region32
      $region31: #{tpu_custom_call.1} parent=5 // pred_region
        // Predicated region
        $region33: #{tpu_custom_call.1} parent=31 // pred_check
          %p195 = pneg %p38
        $region34: #{tpu_custom_call.1} parent=31 // pred_check_branch
          %197 = sbr.rel (%p195) target = $region36
        $region35: #{tpu_custom_call.1} parent=31 // pred_region
          %s198 = sand.u32 %s28, 1
          %s199 = scalar_lea.sflag [#allocation3], %s198
          %s200 = sand.u32 %s28, 1
          %s201 = smul.addr %s200, 128
          %s202 = scalar_lea.vmem [#allocation2], %s201
          %s203 = smul.u32 8, %s18
          %s205 = ssub.s32 2048, 2048
          %206 = vsyncadd %s199, %s205
          %s207 = smul.addr %s203, 4
          %s208 = smul.addr %s207, 64
          %s209 = scalar_lea.hbm %s0, %s208
          %s210 = sshll.u32 %s202, 4
          %s211 = int_to_ptr.vmem [resolvable:$true] %s210
          %216 = dma.hbm_to_vmem [thread:$0]  %s209, 2048, %s211, %s199, 128, 128, 8
        $region36: #{tpu_custom_call.1} parent=31 // pred_fallthru
          _
      $region32: #{tpu_custom_call.1} parent=5 // pred_fallthru
        _
      %p217 = scmp.le.s32.totalorder 1, %s18
      %p218 = scmp.lt.s32.totalorder %s18, 3
      %p219 = pnand %p217, %p218
      %p220 = pneg %p219
      // Predicated region
      $region37: #{tpu_custom_call.1} parent=5 // pred_check
        _
      $region38: #{tpu_custom_call.1} parent=5 // pred_check_branch
        %222 = sbr.rel (%p219) target = $region40
      $region39: #{tpu_custom_call.1} parent=5 // pred_region
        %s223 = ssub.s32 %s18, 1
        %s224 = sand.u32 %s31, 1
        %s225 = scalar_lea.sflag [#allocation3], %s224
        %s226 = sand.u32 %s31, 1
        %s227 = smul.addr %s226, 128
        %s228 = scalar_lea.vmem [#allocation2], %s227
        // Predicated region
        $region41: #{tpu_custom_call.1} parent=39 // pred_check
          %p229 = pneg %p44
        $region42: #{tpu_custom_call.1} parent=39 // pred_check_branch
          %231 = sbr.rel (%p229) target = $region44
        $region43: #{tpu_custom_call.1} parent=39 // pred_region
          %232 = dma.done %s225, 2048
        $region44: #{tpu_custom_call.1} parent=39 // pred_fallthru
          _
        // Predicated region
        $region45: #{tpu_custom_call.1} parent=39 // pred_check
          %p233 = pneg %p65
        $region46: #{tpu_custom_call.1} parent=39 // pred_check_branch
          %235 = sbr.rel (%p233) target = $region48
        $region47: #{tpu_custom_call.1} parent=39 // pred_region
          %236 = dma.done [#allocation6], 6912
        $region48: #{tpu_custom_call.1} parent=39 // pred_fallthru
          _
        %s237 = sand.u32 %s31, 1
        %s238 = scalar_lea.sflag [#allocation3], %s237
        %s239 = sand.u32 %s31, 1
        %s240 = smul.addr %s239, 128
        %s241 = scalar_lea.vmem [#allocation2], %s240
        %p242 = pneg %p44
        %p243 = pneg %p41
        %p244 = pneg %p65
        %p245 = pneg %p62
        %p246 = pneg %p86
        %p247 = pneg %p83
        %p248 = pneg %p107
        %p249 = pneg %p104
        %p250 = pneg %p128
        %p251 = pneg %p125
        %p252 = pneg %p154
        %p253 = pneg %p151
        %s254 = sand.u32 %s141, 1
        %s255 = scalar_lea.sflag [#allocation4], %s254
        %s256 = sand.u32 %s141, 1
        %s257 = smul.addr %s256, 8
        %s258 = scalar_lea.vmem [#allocation7], %s257
        %s259 = smul.u32 8, %s23
        %v261 = vld [vmem:[%s228] sm:$0xff]
        %v262 = vld [vmem:[%s228 + $0x8] sm:$0xff]
        %v263 = vld [vmem:[%s228 + $0x10] sm:$0xff]
        %v264 = vld [vmem:[%s228 + $0x18] sm:$0xff]
        %v265 = vld [vmem:[%s228 + $0x20] sm:$0xff]
        %v266 = vld [vmem:[%s228 + $0x28] sm:$0xff]
        %v267 = vld [vmem:[%s228 + $0x30] sm:$0xff]
        %v268 = vld [vmem:[%s228 + $0x38] sm:$0xff]
        %v269 = vld [vmem:[%s228 + $0x40] sm:$0xff]
        %v270 = vld [vmem:[%s228 + $0x48] sm:$0xff]
        %v271 = vld [vmem:[%s228 + $0x50] sm:$0xff]
        %v272 = vld [vmem:[%s228 + $0x58] sm:$0xff]
        %v273 = vld [vmem:[%s228 + $0x60] sm:$0xff]
        %v274 = vld [vmem:[%s228 + $0x68] sm:$0xff]
        %v275 = vld [vmem:[%s228 + $0x70] sm:$0xff]
        %v276 = vld [vmem:[%s228 + $0x78] sm:$0xff]
        %v277 = vld [vmem:[#allocation5] sm:$0xff]
        %v278 = vld [vmem:[#allocation5 + $0x8] sm:$0xff]
        %v279 = vld [vmem:[#allocation5 + $0x10] sm:$0xff]
        %v280 = vld [vmem:[#allocation5 + $0x18] sm:$0xff]
        %v281 = vld [vmem:[#allocation5 + $0x20] sm:$0xff]
        %v282 = vld [vmem:[#allocation5 + $0x28] sm:$0xff]
        %v283 = vld [vmem:[#allocation5 + $0x30] sm:$0xff]
        %v284 = vld [vmem:[#allocation5 + $0x38] sm:$0xff]
        %v285 = vld [vmem:[#allocation5 + $0x40] sm:$0xff]
        %v286 = vld [vmem:[#allocation5 + $0x48] sm:$0xff]
        %v287 = vld [vmem:[#allocation5 + $0x50] sm:$0xff]
        %v288 = vld [vmem:[#allocation5 + $0x58] sm:$0xff]
        %v289 = vld [vmem:[#allocation5 + $0x60] sm:$0xff]
        %v290 = vld [vmem:[#allocation5 + $0x68] sm:$0xff]
        %v291 = vld [vmem:[#allocation5 + $0x70] sm:$0xff]
        %v292 = vld [vmem:[#allocation5 + $0x78] sm:$0xff]
        %v293 = vld [vmem:[#allocation5 + $0x80] sm:$0xff]
        %v294 = vld [vmem:[#allocation5 + $0x88] sm:$0xff]
        %v295 = vld [vmem:[#allocation5 + $0x90] sm:$0xff]
        %v296 = vld [vmem:[#allocation5 + $0x98] sm:$0xff]
        %v297 = vld [vmem:[#allocation5 + $0xa0] sm:$0xff]
        %v298 = vld [vmem:[#allocation5 + $0xa8] sm:$0xff]
        %v299 = vld [vmem:[#allocation5 + $0xb0] sm:$0xff]
        %v300 = vld [vmem:[#allocation5 + $0xb8] sm:$0xff]
        %v301 = vld [vmem:[#allocation5 + $0xc0] sm:$0xff]
        %v302 = vld [vmem:[#allocation5 + $0xc8] sm:$0xff]
        %v303 = vld [vmem:[#allocation5 + $0xd0] sm:$0xff]
        %v304 = vld [vmem:[#allocation5 + $0xd8] sm:$0xff]
        %v305 = vld [vmem:[#allocation5 + $0xe0] sm:$0xff]
        %v306 = vld [vmem:[#allocation5 + $0xe8] sm:$0xff]
        %v307 = vld [vmem:[#allocation5 + $0xf0] sm:$0xff]
        %v308 = vld [vmem:[#allocation5 + $0xf8] sm:$0xff]
        %v309 = vld [vmem:[#allocation5 + $0x100] sm:$0xff]
        %v310 = vld [vmem:[#allocation5 + $0x108] sm:$0xff]
        %v311 = vld [vmem:[#allocation5 + $0x110] sm:$0xff]
        %v312 = vld [vmem:[#allocation5 + $0x118] sm:$0xff]
        %v313 = vld [vmem:[#allocation5 + $0x120] sm:$0xff]
        %v314 = vld [vmem:[#allocation5 + $0x128] sm:$0xff]
        %v315 = vld [vmem:[#allocation5 + $0x130] sm:$0xff]
        %v316 = vld [vmem:[#allocation5 + $0x138] sm:$0xff]
        %v317 = vld [vmem:[#allocation5 + $0x140] sm:$0xff]
        %v318 = vld [vmem:[#allocation5 + $0x148] sm:$0xff]
        %v319 = vld [vmem:[#allocation5 + $0x150] sm:$0xff]
        %v320 = vld [vmem:[#allocation5 + $0x158] sm:$0xff]
        %v321 = vld [vmem:[#allocation5 + $0x160] sm:$0xff]
        %v322 = vld [vmem:[#allocation5 + $0x168] sm:$0xff]
        %v323 = vld [vmem:[#allocation5 + $0x170] sm:$0xff]
        %v324 = vld [vmem:[#allocation5 + $0x178] sm:$0xff]
        %v325 = vld [vmem:[#allocation5 + $0x180] sm:$0xff]
        %v326 = vld [vmem:[#allocation5 + $0x188] sm:$0xff]
        %v327 = vld [vmem:[#allocation5 + $0x190] sm:$0xff]
        %v328 = vld [vmem:[#allocation5 + $0x198] sm:$0xff]
        %v329 = vld [vmem:[#allocation5 + $0x1a0] sm:$0xff]
        %v330 = vld [vmem:[#allocation5 + $0x1a8] sm:$0xff]
        %v347 = vunpack.c.l.b16 %v261
        %v348 = vunpack.c.h.b16 %v261
        %v349 = vunpack.c.l.b16 %v262
        %v350 = vunpack.c.h.b16 %v262
        %v351 = vunpack.c.l.b16 %v263
        %v352 = vunpack.c.h.b16 %v263
        %v353 = vunpack.c.l.b16 %v264
        %v354 = vunpack.c.h.b16 %v264
        %v355 = vunpack.c.l.b16 %v265
        %v356 = vunpack.c.h.b16 %v265
        %v357 = vunpack.c.l.b16 %v266
        %v358 = vunpack.c.h.b16 %v266
        %v359 = vunpack.c.l.b16 %v267
        %v360 = vunpack.c.h.b16 %v267
        %v361 = vunpack.c.l.b16 %v268
        %v362 = vunpack.c.h.b16 %v268
        %v363 = vunpack.c.l.b16 %v269
        %v364 = vunpack.c.h.b16 %v269
        %v365 = vunpack.c.l.b16 %v270
        %v366 = vunpack.c.h.b16 %v270
        %v367 = vunpack.c.l.b16 %v271
        %v368 = vunpack.c.h.b16 %v271
        %v369 = vunpack.c.l.b16 %v272
        %v370 = vunpack.c.h.b16 %v272
        %v371 = vunpack.c.l.b16 %v273
        %v372 = vunpack.c.h.b16 %v273
        %v373 = vunpack.c.l.b16 %v274
        %v374 = vunpack.c.h.b16 %v274
        %v375 = vunpack.c.l.b16 %v275
        %v376 = vunpack.c.h.b16 %v275
        %v377 = vunpack.c.l.b16 %v276
        %v378 = vunpack.c.h.b16 %v276
        %v379 = vpack.c.b16 %v349, %v347
        %v380 = vpack.c.b16 %v350, %v348
        %v381 = vpack.c.b16 %v353, %v351
        %v382 = vpack.c.b16 %v354, %v352
        %v383 = vpack.c.b16 %v357, %v355
        %v384 = vpack.c.b16 %v358, %v356
        %v385 = vpack.c.b16 %v361, %v359
        %v386 = vpack.c.b16 %v362, %v360
        %v387 = vpack.c.b16 %v365, %v363
        %v388 = vpack.c.b16 %v366, %v364
        %v389 = vpack.c.b16 %v369, %v367
        %v390 = vpack.c.b16 %v370, %v368
        %v391 = vpack.c.b16 %v373, %v371
        %v392 = vpack.c.b16 %v374, %v372
        %v393 = vpack.c.b16 %v377, %v375
        %v394 = vpack.c.b16 %v378, %v376
        %v457 = vunpack.c.l.b16 %v277
        %v458 = vunpack.c.h.b16 %v277
        %v459 = vunpack.c.l.b16 %v278
        %v460 = vunpack.c.h.b16 %v278
        %v461 = vunpack.c.l.b16 %v279
        %v462 = vunpack.c.h.b16 %v279
        %v463 = vunpack.c.l.b16 %v280
        %v464 = vunpack.c.h.b16 %v280
        %v465 = vunpack.c.l.b16 %v281
        %v466 = vunpack.c.h.b16 %v281
        %v467 = vunpack.c.l.b16 %v282
        %v468 = vunpack.c.h.b16 %v282
        %v469 = vunpack.c.l.b16 %v283
        %v470 = vunpack.c.h.b16 %v283
        %v471 = vunpack.c.l.b16 %v284
        %v472 = vunpack.c.h.b16 %v284
        %v473 = vunpack.c.l.b16 %v285
        %v474 = vunpack.c.h.b16 %v285
        %v475 = vunpack.c.l.b16 %v286
        %v476 = vunpack.c.h.b16 %v286
        %v477 = vunpack.c.l.b16 %v287
        %v478 = vunpack.c.h.b16 %v287
        %v479 = vunpack.c.l.b16 %v288
        %v480 = vunpack.c.h.b16 %v288
        %v481 = vunpack.c.l.b16 %v289
        %v482 = vunpack.c.h.b16 %v289
        %v483 = vunpack.c.l.b16 %v290
        %v484 = vunpack.c.h.b16 %v290
        %v485 = vunpack.c.l.b16 %v291
        %v486 = vunpack.c.h.b16 %v291
        %v487 = vunpack.c.l.b16 %v292
        %v488 = vunpack.c.h.b16 %v292
        %v489 = vunpack.c.l.b16 %v293
        %v490 = vunpack.c.h.b16 %v293
        %v491 = vunpack.c.l.b16 %v294
        %v492 = vunpack.c.h.b16 %v294
        %v493 = vunpack.c.l.b16 %v295
        %v494 = vunpack.c.h.b16 %v295
        %v495 = vunpack.c.l.b16 %v296
        %v496 = vunpack.c.h.b16 %v296
        %v497 = vunpack.c.l.b16 %v297
        %v498 = vunpack.c.h.b16 %v297
        %v499 = vunpack.c.l.b16 %v298
        %v500 = vunpack.c.h.b16 %v298
        %v501 = vunpack.c.l.b16 %v299
        %v502 = vunpack.c.h.b16 %v299
        %v503 = vunpack.c.l.b16 %v300
        %v504 = vunpack.c.h.b16 %v300
        %v505 = vunpack.c.l.b16 %v301
        %v506 = vunpack.c.h.b16 %v301
        %v507 = vunpack.c.l.b16 %v302
        %v508 = vunpack.c.h.b16 %v302
        %v509 = vunpack.c.l.b16 %v303
        %v510 = vunpack.c.h.b16 %v303
        %v511 = vunpack.c.l.b16 %v304
        %v512 = vunpack.c.h.b16 %v304
        %v513 = vunpack.c.l.b16 %v305
        %v514 = vunpack.c.h.b16 %v305
        %v515 = vunpack.c.l.b16 %v306
        %v516 = vunpack.c.h.b16 %v306
        %v517 = vunpack.c.l.b16 %v307
        %v518 = vunpack.c.h.b16 %v307
        %v519 = vunpack.c.l.b16 %v308
        %v520 = vunpack.c.h.b16 %v308
        %v521 = vunpack.c.l.b16 %v309
        %v522 = vunpack.c.h.b16 %v309
        %v523 = vunpack.c.l.b16 %v310
        %v524 = vunpack.c.h.b16 %v310
        %v525 = vunpack.c.l.b16 %v311
        %v526 = vunpack.c.h.b16 %v311
        %v527 = vunpack.c.l.b16 %v312
        %v528 = vunpack.c.h.b16 %v312
        %v529 = vunpack.c.l.b16 %v313
        %v530 = vunpack.c.h.b16 %v313
        %v531 = vunpack.c.l.b16 %v314
        %v532 = vunpack.c.h.b16 %v314
        %v533 = vunpack.c.l.b16 %v315
        %v534 = vunpack.c.h.b16 %v315
        %v535 = vunpack.c.l.b16 %v316
        %v536 = vunpack.c.h.b16 %v316
        %v537 = vunpack.c.l.b16 %v317
        %v538 = vunpack.c.h.b16 %v317
        %v539 = vunpack.c.l.b16 %v318
        %v540 = vunpack.c.h.b16 %v318
        %v541 = vunpack.c.l.b16 %v319
        %v542 = vunpack.c.h.b16 %v319
        %v543 = vunpack.c.l.b16 %v320
        %v544 = vunpack.c.h.b16 %v320
        %v545 = vunpack.c.l.b16 %v321
        %v546 = vunpack.c.h.b16 %v321
        %v547 = vunpack.c.l.b16 %v322
        %v548 = vunpack.c.h.b16 %v322
        %v549 = vunpack.c.l.b16 %v323
        %v550 = vunpack.c.h.b16 %v323
        %v551 = vunpack.c.l.b16 %v324
        %v552 = vunpack.c.h.b16 %v324
        %v553 = vunpack.c.l.b16 %v325
        %v554 = vunpack.c.h.b16 %v325
        %v555 = vunpack.c.l.b16 %v326
        %v556 = vunpack.c.h.b16 %v326
        %v557 = vunpack.c.l.b16 %v327
        %v558 = vunpack.c.h.b16 %v327
        %v559 = vunpack.c.l.b16 %v328
        %v560 = vunpack.c.h.b16 %v328
        %v561 = vunpack.c.l.b16 %v329
        %v562 = vunpack.c.h.b16 %v329
        %v563 = vunpack.c.l.b16 %v330
        %v564 = vunpack.c.h.b16 %v330
        %v565 = vpack.c.b16 %v461, %v457
        %v566 = vpack.c.b16 %v462, %v458
        %v567 = vpack.c.b16 %v463, %v459
        %v568 = vpack.c.b16 %v464, %v460
        %v569 = vpack.c.b16 %v469, %v465
        %v570 = vpack.c.b16 %v470, %v466
        %v571 = vpack.c.b16 %v471, %v467
        %v572 = vpack.c.b16 %v472, %v468
        %v573 = vpack.c.b16 %v477, %v473
        %v574 = vpack.c.b16 %v478, %v474
        %v575 = vpack.c.b16 %v479, %v475
        %v576 = vpack.c.b16 %v480, %v476
        %v577 = vpack.c.b16 %v485, %v481
        %v578 = vpack.c.b16 %v486, %v482
        %v579 = vpack.c.b16 %v487, %v483
        %v580 = vpack.c.b16 %v488, %v484
        %v581 = vpack.c.b16 %v493, %v489
        %v582 = vpack.c.b16 %v494, %v490
        %v583 = vpack.c.b16 %v495, %v491
        %v584 = vpack.c.b16 %v496, %v492
        %v585 = vpack.c.b16 %v501, %v497
        %v586 = vpack.c.b16 %v502, %v498
        %v587 = vpack.c.b16 %v503, %v499
        %v588 = vpack.c.b16 %v504, %v500
        %v589 = vpack.c.b16 %v509, %v505
        %v590 = vpack.c.b16 %v510, %v506
        %v591 = vpack.c.b16 %v511, %v507
        %v592 = vpack.c.b16 %v512, %v508
        %v593 = vpack.c.b16 %v517, %v513
        %v594 = vpack.c.b16 %v518, %v514
        %v595 = vpack.c.b16 %v519, %v515
        %v596 = vpack.c.b16 %v520, %v516
        %v597 = vpack.c.b16 %v525, %v521
        %v598 = vpack.c.b16 %v526, %v522
        %v599 = vpack.c.b16 %v527, %v523
        %v600 = vpack.c.b16 %v528, %v524
        %v601 = vpack.c.b16 %v533, %v529
        %v602 = vpack.c.b16 %v534, %v530
        %v603 = vpack.c.b16 %v535, %v531
        %v604 = vpack.c.b16 %v536, %v532
        %v605 = vpack.c.b16 %v541, %v537
        %v606 = vpack.c.b16 %v542, %v538
        %v607 = vpack.c.b16 %v543, %v539
        %v608 = vpack.c.b16 %v544, %v540
        %v609 = vpack.c.b16 %v549, %v545
        %v610 = vpack.c.b16 %v550, %v546
        %v611 = vpack.c.b16 %v551, %v547
        %v612 = vpack.c.b16 %v552, %v548
        %v613 = vpack.c.b16 %v557, %v553
        %v614 = vpack.c.b16 %v558, %v554
        %v615 = vpack.c.b16 %v559, %v555
        %v616 = vpack.c.b16 %v560, %v556
        %v617 = vpack.c.b16 %v561, %v561
        %v618 = vpack.c.b16 %v562, %v562
        %v619 = vpack.c.b16 %v563, %v563
        %v620 = vpack.c.b16 %v564, %v564
        %vm673 = vcmask 719872
        %v675 = vsel %vm673, %v380, 0
        %v678 = vsel %vm673, %v382, 0
        %v681 = vsel %vm673, %v384, 0
        %v684 = vsel %vm673, %v386, 0
        %v687 = vsel %vm673, %v388, 0
        %v690 = vsel %vm673, %v390, 0
        %v693 = vsel %vm673, %v392, 0
        %v696 = vsel %vm673, %v394, 0
        %vm698 = vcmask 1043456
        %v700 = vsel %vm698, %v617, 0
        %v703 = vsel %vm698, %v618, 0
        %v706 = vsel %vm698, %v619, 0
        %v709 = vsel %vm698, %v620, 0
        %711 = vmatprep.subr.bf16.mxu0 %v594
        %712 = vmatpush1.bf16.msra.mxu0 %v593
        %713 = vmatprep.subr.bf16.mxu0 %v590
        %714 = vmatpush1.bf16.msra.mxu0 %v589
        %715 = vmatprep.subr.bf16.mxu0 %v586
        %716 = vmatpush1.bf16.msra.mxu0 %v585
        %717 = vmatprep.subr.bf16.mxu0 %v582
        %718 = vmatpush1.bf16.msra.mxu0 %v581
        %719 = vmatprep.subr.bf16.mxu0 %v578
        %720 = vmatpush1.bf16.msra.mxu0 %v577
        %721 = vmatprep.subr.bf16.mxu0 %v574
        %722 = vmatpush1.bf16.msra.mxu0 %v573
        %723 = vmatprep.subr.bf16.mxu0 %v570
        %724 = vmatpush1.bf16.msra.mxu0 %v569
        %725 = vmatprep.subr.bf16.mxu0 %v566
        %726 = vmatpush1.bf16.msra.mxu0 %v565
        %727 = vmatprep.subr.bf16.mxu0 0
        %728 = vmatpush2.bf16.msra.mxu0 0
        %729 = vmatprep.subr.bf16.mxu0 0
        %730 = vmatpush2.bf16.msra.mxu0 0
        %731 = vmatprep.subr.bf16.mxu0 %v703
        %732 = vmatpush2.bf16.msra.mxu0 %v700
        %733 = vmatprep.subr.bf16.mxu0 %v614
        %734 = vmatpush2.bf16.msra.mxu0 %v613
        %735 = vmatprep.subr.bf16.mxu0 %v610
        %736 = vmatpush2.bf16.msra.mxu0 %v609
        %737 = vmatprep.subr.bf16.mxu0 %v606
        %738 = vmatpush2.bf16.msra.mxu0 %v605
        %739 = vmatprep.subr.bf16.mxu0 %v602
        %740 = vmatpush2.bf16.msra.mxu0 %v601
        %741 = vmatprep.subr.bf16.mxu0 %v598
        %742 = vmatpush2.bf16.msra.mxu0 %v597
        %743 = vmatprep.mubr.bf16.mxu0 %v675
        %744 = vmatmul.mubr.bf16.gmra.mxu0 %v379
        %v745 = vpop.f32.mrf.mxu0
        %v746 = vadd.f32 0.0, %v745
        %v747 = vpop.f32.mrf.mxu0
        %v748 = vadd.f32 0.0, %v747
        %v749 = vpop.f32.mrf.mxu0
        %v750 = vadd.f32 0.0, %v749
        %v751 = vpop.f32.mrf.mxu0
        %v752 = vadd.f32 0.0, %v751
        %753 = vmatprep.mubr.bf16.mxu0 %v678
        %754 = vmatmul.mubr.bf16.gmra.mxu0 %v381
        %v755 = vpop.f32.mrf.mxu0
        %v756 = vadd.f32 0.0, %v755
        %v757 = vpop.f32.mrf.mxu0
        %v758 = vadd.f32 0.0, %v757
        %v759 = vpop.f32.mrf.mxu0
        %v760 = vadd.f32 0.0, %v759
        %v761 = vpop.f32.mrf.mxu0
        %v762 = vadd.f32 0.0, %v761
        %763 = vmatprep.mubr.bf16.mxu0 %v681
        %764 = vmatmul.mubr.bf16.gmra.mxu0 %v383
        %v765 = vpop.f32.mrf.mxu0
        %v766 = vadd.f32 0.0, %v765
        %v767 = vpop.f32.mrf.mxu0
        %v768 = vadd.f32 0.0, %v767
        %v769 = vpop.f32.mrf.mxu0
        %v770 = vadd.f32 0.0, %v769
        %v771 = vpop.f32.mrf.mxu0
        %v772 = vadd.f32 0.0, %v771
        %773 = vmatprep.mubr.bf16.mxu0 %v684
        %774 = vmatmul.mubr.bf16.gmra.mxu0 %v385
        %v775 = vpop.f32.mrf.mxu0
        %v776 = vadd.f32 0.0, %v775
        %v777 = vpop.f32.mrf.mxu0
        %v778 = vadd.f32 0.0, %v777
        %v779 = vpop.f32.mrf.mxu0
        %v780 = vadd.f32 0.0, %v779
        %v781 = vpop.f32.mrf.mxu0
        %v782 = vadd.f32 0.0, %v781
        %783 = vmatprep.mubr.bf16.mxu0 %v687
        %784 = vmatmul.mubr.bf16.gmra.mxu0 %v387
        %v785 = vpop.f32.mrf.mxu0
        %v786 = vadd.f32 0.0, %v785
        %v787 = vpop.f32.mrf.mxu0
        %v788 = vadd.f32 0.0, %v787
        %v789 = vpop.f32.mrf.mxu0
        %v790 = vadd.f32 0.0, %v789
        %v791 = vpop.f32.mrf.mxu0
        %v792 = vadd.f32 0.0, %v791
        %793 = vmatprep.mubr.bf16.mxu0 %v690
        %794 = vmatmul.mubr.bf16.gmra.mxu0 %v389
        %v795 = vpop.f32.mrf.mxu0
        %v796 = vadd.f32 0.0, %v795
        %v797 = vpop.f32.mrf.mxu0
        %v798 = vadd.f32 0.0, %v797
        %v799 = vpop.f32.mrf.mxu0
        %v800 = vadd.f32 0.0, %v799
        %v801 = vpop.f32.mrf.mxu0
        %v802 = vadd.f32 0.0, %v801
        %803 = vmatprep.mubr.bf16.mxu0 %v693
        %804 = vmatmul.mubr.bf16.gmra.mxu0 %v391
        %v805 = vpop.f32.mrf.mxu0
        %v806 = vadd.f32 0.0, %v805
        %v807 = vpop.f32.mrf.mxu0
        %v808 = vadd.f32 0.0, %v807
        %v809 = vpop.f32.mrf.mxu0
        %v810 = vadd.f32 0.0, %v809
        %v811 = vpop.f32.mrf.mxu0
        %v812 = vadd.f32 0.0, %v811
        %813 = vmatprep.mubr.bf16.mxu0 %v696
        %814 = vmatmul.mubr.bf16.gmra.mxu0 %v393
        %v815 = vpop.f32.mrf.mxu0
        %v816 = vadd.f32 0.0, %v815
        %v817 = vpop.f32.mrf.mxu0
        %v818 = vadd.f32 0.0, %v817
        %v819 = vpop.f32.mrf.mxu0
        %v820 = vadd.f32 0.0, %v819
        %v821 = vpop.f32.mrf.mxu0
        %v822 = vadd.f32 0.0, %v821
        %823 = vdwg.mxu0
        %824 = vmatprep.subr.bf16.mxu0 %v596
        %825 = vmatpush1.bf16.msra.mxu0 %v595
        %826 = vmatprep.subr.bf16.mxu0 %v592
        %827 = vmatpush1.bf16.msra.mxu0 %v591
        %828 = vmatprep.subr.bf16.mxu0 %v588
        %829 = vmatpush1.bf16.msra.mxu0 %v587
        %830 = vmatprep.subr.bf16.mxu0 %v584
        %831 = vmatpush1.bf16.msra.mxu0 %v583
        %832 = vmatprep.subr.bf16.mxu0 %v580
        %833 = vmatpush1.bf16.msra.mxu0 %v579
        %834 = vmatprep.subr.bf16.mxu0 %v576
        %835 = vmatpush1.bf16.msra.mxu0 %v575
        %836 = vmatprep.subr.bf16.mxu0 %v572
        %837 = vmatpush1.bf16.msra.mxu0 %v571
        %838 = vmatprep.subr.bf16.mxu0 %v568
        %839 = vmatpush1.bf16.msra.mxu0 %v567
        %840 = vmatprep.subr.bf16.mxu0 0
        %841 = vmatpush2.bf16.msra.mxu0 0
        %842 = vmatprep.subr.bf16.mxu0 0
        %843 = vmatpush2.bf16.msra.mxu0 0
        %844 = vmatprep.subr.bf16.mxu0 %v709
        %845 = vmatpush2.bf16.msra.mxu0 %v706
        %846 = vmatprep.subr.bf16.mxu0 %v616
        %847 = vmatpush2.bf16.msra.mxu0 %v615
        %848 = vmatprep.subr.bf16.mxu0 %v612
        %849 = vmatpush2.bf16.msra.mxu0 %v611
        %850 = vmatprep.subr.bf16.mxu0 %v608
        %851 = vmatpush2.bf16.msra.mxu0 %v607
        %852 = vmatprep.subr.bf16.mxu0 %v604
        %853 = vmatpush2.bf16.msra.mxu0 %v603
        %854 = vmatprep.subr.bf16.mxu0 %v600
        %855 = vmatpush2.bf16.msra.mxu0 %v599
        %856 = vmatprep.mubr.bf16.mxu0 %v675
        %857 = vmatmul.mubr.bf16.gmra.mxu0 %v379
        %v858 = vpop.f32.mrf.mxu0
        %v859 = vadd.f32 0.0, %v858
        %v860 = vpop.f32.mrf.mxu0
        %v861 = vadd.f32 0.0, %v860
        %v862 = vpop.f32.mrf.mxu0
        %v863 = vadd.f32 0.0, %v862
        %v864 = vpop.f32.mrf.mxu0
        %v865 = vadd.f32 0.0, %v864
        %866 = vmatprep.mubr.bf16.mxu0 %v678
        %867 = vmatmul.mubr.bf16.gmra.mxu0 %v381
        %v868 = vpop.f32.mrf.mxu0
        %v869 = vadd.f32 0.0, %v868
        %v870 = vpop.f32.mrf.mxu0
        %v871 = vadd.f32 0.0, %v870
        %v872 = vpop.f32.mrf.mxu0
        %v873 = vadd.f32 0.0, %v872
        %v874 = vpop.f32.mrf.mxu0
        %v875 = vadd.f32 0.0, %v874
        %876 = vmatprep.mubr.bf16.mxu0 %v681
        %877 = vmatmul.mubr.bf16.gmra.mxu0 %v383
        %v878 = vpop.f32.mrf.mxu0
        %v879 = vadd.f32 0.0, %v878
        %v880 = vpop.f32.mrf.mxu0
        %v881 = vadd.f32 0.0, %v880
        %v882 = vpop.f32.mrf.mxu0
        %v883 = vadd.f32 0.0, %v882
        %v884 = vpop.f32.mrf.mxu0
        %v885 = vadd.f32 0.0, %v884
        %886 = vmatprep.mubr.bf16.mxu0 %v684
        %887 = vmatmul.mubr.bf16.gmra.mxu0 %v385
        %v888 = vpop.f32.mrf.mxu0
        %v889 = vadd.f32 0.0, %v888
        %v890 = vpop.f32.mrf.mxu0
        %v891 = vadd.f32 0.0, %v890
        %v892 = vpop.f32.mrf.mxu0
        %v893 = vadd.f32 0.0, %v892
        %v894 = vpop.f32.mrf.mxu0
        %v895 = vadd.f32 0.0, %v894
        %896 = vmatprep.mubr.bf16.mxu0 %v687
        %897 = vmatmul.mubr.bf16.gmra.mxu0 %v387
        %v898 = vpop.f32.mrf.mxu0
        %v899 = vadd.f32 0.0, %v898
        %v900 = vpop.f32.mrf.mxu0
        %v901 = vadd.f32 0.0, %v900
        %v902 = vpop.f32.mrf.mxu0
        %v903 = vadd.f32 0.0, %v902
        %v904 = vpop.f32.mrf.mxu0
        %v905 = vadd.f32 0.0, %v904
        %906 = vmatprep.mubr.bf16.mxu0 %v690
        %907 = vmatmul.mubr.bf16.gmra.mxu0 %v389
        %v908 = vpop.f32.mrf.mxu0
        %v909 = vadd.f32 0.0, %v908
        %v910 = vpop.f32.mrf.mxu0
        %v911 = vadd.f32 0.0, %v910
        %v912 = vpop.f32.mrf.mxu0
        %v913 = vadd.f32 0.0, %v912
        %v914 = vpop.f32.mrf.mxu0
        %v915 = vadd.f32 0.0, %v914
        %916 = vmatprep.mubr.bf16.mxu0 %v693
        %917 = vmatmul.mubr.bf16.gmra.mxu0 %v391
        %v918 = vpop.f32.mrf.mxu0
        %v919 = vadd.f32 0.0, %v918
        %v920 = vpop.f32.mrf.mxu0
        %v921 = vadd.f32 0.0, %v920
        %v922 = vpop.f32.mrf.mxu0
        %v923 = vadd.f32 0.0, %v922
        %v924 = vpop.f32.mrf.mxu0
        %v925 = vadd.f32 0.0, %v924
        %926 = vmatprep.mubr.bf16.mxu0 %v696
        %927 = vmatmul.mubr.bf16.gmra.mxu0 %v393
        %v928 = vpop.f32.mrf.mxu0
        %v929 = vadd.f32 0.0, %v928
        %v930 = vpop.f32.mrf.mxu0
        %v931 = vadd.f32 0.0, %v930
        %v932 = vpop.f32.mrf.mxu0
        %v933 = vadd.f32 0.0, %v932
        %v934 = vpop.f32.mrf.mxu0
        %v935 = vadd.f32 0.0, %v934
        %936 = vdwg.mxu0
        %v937 = vld [vmem:[%s2] sm:$0xf]
        %v939 = vlaneseq
        %v940 = vshrl.u32 %v939, 7
        %v941 = vsub.s32 0, %v940
        %v942 = vrot.slane %v937, %v941
        %v943 = vlaneseq
        %v944 = vshrl.u32 %v943, 7
        %v945 = vsub.s32 1, %v944
        %v946 = vrot.slane %v937, %v945
        %v947 = vlaneseq
        %v948 = vshrl.u32 %v947, 7
        %v949 = vsub.s32 2, %v948
        %v950 = vrot.slane %v937, %v949
        %v951 = vlaneseq
        %v952 = vshrl.u32 %v951, 7
        %v953 = vsub.s32 3, %v952
        %v954 = vrot.slane %v937, %v953
        %v959 = vmul.f32 %v746, %v942
        %v960 = vmul.f32 %v748, %v946
        %v961 = vmul.f32 %v859, %v950
        %v962 = vmul.f32 %v861, %v954
        %v963 = vmul.f32 %v750, %v942
        %v964 = vmul.f32 %v752, %v946
        %v965 = vmul.f32 %v863, %v950
        %v966 = vmul.f32 %v865, %v954
        %v967 = vmul.f32 %v756, %v942
        %v968 = vmul.f32 %v758, %v946
        %v969 = vmul.f32 %v869, %v950
        %v970 = vmul.f32 %v871, %v954
        %v971 = vmul.f32 %v760, %v942
        %v972 = vmul.f32 %v762, %v946
        %v973 = vmul.f32 %v873, %v950
        %v974 = vmul.f32 %v875, %v954
        %v975 = vmul.f32 %v766, %v942
        %v976 = vmul.f32 %v768, %v946
        %v977 = vmul.f32 %v879, %v950
        %v978 = vmul.f32 %v881, %v954
        %v979 = vmul.f32 %v770, %v942
        %v980 = vmul.f32 %v772, %v946
        %v981 = vmul.f32 %v883, %v950
        %v982 = vmul.f32 %v885, %v954
        %v983 = vmul.f32 %v776, %v942
        %v984 = vmul.f32 %v778, %v946
        %v985 = vmul.f32 %v889, %v950
        %v986 = vmul.f32 %v891, %v954
        %v987 = vmul.f32 %v780, %v942
        %v988 = vmul.f32 %v782, %v946
        %v989 = vmul.f32 %v893, %v950
        %v990 = vmul.f32 %v895, %v954
        %v991 = vmul.f32 %v786, %v942
        %v992 = vmul.f32 %v788, %v946
        %v993 = vmul.f32 %v899, %v950
        %v994 = vmul.f32 %v901, %v954
        %v995 = vmul.f32 %v790, %v942
        %v996 = vmul.f32 %v792, %v946
        %v997 = vmul.f32 %v903, %v950
        %v998 = vmul.f32 %v905, %v954
        %v999 = vmul.f32 %v796, %v942
        %v1000 = vmul.f32 %v798, %v946
        %v1001 = vmul.f32 %v909, %v950
        %v1002 = vmul.f32 %v911, %v954
        %v1003 = vmul.f32 %v800, %v942
        %v1004 = vmul.f32 %v802, %v946
        %v1005 = vmul.f32 %v913, %v950
        %v1006 = vmul.f32 %v915, %v954
        %v1007 = vmul.f32 %v806, %v942
        %v1008 = vmul.f32 %v808, %v946
        %v1009 = vmul.f32 %v919, %v950
        %v1010 = vmul.f32 %v921, %v954
        %v1011 = vmul.f32 %v810, %v942
        %v1012 = vmul.f32 %v812, %v946
        %v1013 = vmul.f32 %v923, %v950
        %v1014 = vmul.f32 %v925, %v954
        %v1015 = vmul.f32 %v816, %v942
        %v1016 = vmul.f32 %v818, %v946
        %v1017 = vmul.f32 %v929, %v950
        %v1018 = vmul.f32 %v931, %v954
        %v1019 = vmul.f32 %v820, %v942
        %v1020 = vmul.f32 %v822, %v946
        %v1021 = vmul.f32 %v933, %v950
        %v1022 = vmul.f32 %v935, %v954
        %v1023 = vld [vmem:[%s3] sm:$0xf]
        %v1025 = vlaneseq
        %v1026 = vshrl.u32 %v1025, 7
        %v1027 = vsub.s32 0, %v1026
        %v1028 = vrot.slane %v1023, %v1027
        %v1029 = vlaneseq
        %v1030 = vshrl.u32 %v1029, 7
        %v1031 = vsub.s32 1, %v1030
        %v1032 = vrot.slane %v1023, %v1031
        %v1033 = vlaneseq
        %v1034 = vshrl.u32 %v1033, 7
        %v1035 = vsub.s32 2, %v1034
        %v1036 = vrot.slane %v1023, %v1035
        %v1037 = vlaneseq
        %v1038 = vshrl.u32 %v1037, 7
        %v1039 = vsub.s32 3, %v1038
        %v1040 = vrot.slane %v1023, %v1039
        %v1045 = vadd.f32 %v959, %v1028
        %v1046 = vadd.f32 %v960, %v1032
        %v1047 = vadd.f32 %v961, %v1036
        %v1048 = vadd.f32 %v962, %v1040
        %v1049 = vadd.f32 %v963, %v1028
        %v1050 = vadd.f32 %v964, %v1032
        %v1051 = vadd.f32 %v965, %v1036
        %v1052 = vadd.f32 %v966, %v1040
        %v1053 = vadd.f32 %v967, %v1028
        %v1054 = vadd.f32 %v968, %v1032
        %v1055 = vadd.f32 %v969, %v1036
        %v1056 = vadd.f32 %v970, %v1040
        %v1057 = vadd.f32 %v971, %v1028
        %v1058 = vadd.f32 %v972, %v1032
        %v1059 = vadd.f32 %v973, %v1036
        %v1060 = vadd.f32 %v974, %v1040
        %v1061 = vadd.f32 %v975, %v1028
        %v1062 = vadd.f32 %v976, %v1032
        %v1063 = vadd.f32 %v977, %v1036
        %v1064 = vadd.f32 %v978, %v1040
        %v1065 = vadd.f32 %v979, %v1028
        %v1066 = vadd.f32 %v980, %v1032
        %v1067 = vadd.f32 %v981, %v1036
        %v1068 = vadd.f32 %v982, %v1040
        %v1069 = vadd.f32 %v983, %v1028
        %v1070 = vadd.f32 %v984, %v1032
        %v1071 = vadd.f32 %v985, %v1036
        %v1072 = vadd.f32 %v986, %v1040
        %v1073 = vadd.f32 %v987, %v1028
        %v1074 = vadd.f32 %v988, %v1032
        %v1075 = vadd.f32 %v989, %v1036
        %v1076 = vadd.f32 %v990, %v1040
        %v1077 = vadd.f32 %v991, %v1028
        %v1078 = vadd.f32 %v992, %v1032
        %v1079 = vadd.f32 %v993, %v1036
        %v1080 = vadd.f32 %v994, %v1040
        %v1081 = vadd.f32 %v995, %v1028
        %v1082 = vadd.f32 %v996, %v1032
        %v1083 = vadd.f32 %v997, %v1036
        %v1084 = vadd.f32 %v998, %v1040
        %v1085 = vadd.f32 %v999, %v1028
        %v1086 = vadd.f32 %v1000, %v1032
        %v1087 = vadd.f32 %v1001, %v1036
        %v1088 = vadd.f32 %v1002, %v1040
        %v1089 = vadd.f32 %v1003, %v1028
        %v1090 = vadd.f32 %v1004, %v1032
        %v1091 = vadd.f32 %v1005, %v1036
        %v1092 = vadd.f32 %v1006, %v1040
        %v1093 = vadd.f32 %v1007, %v1028
        %v1094 = vadd.f32 %v1008, %v1032
        %v1095 = vadd.f32 %v1009, %v1036
        %v1096 = vadd.f32 %v1010, %v1040
        %v1097 = vadd.f32 %v1011, %v1028
        %v1098 = vadd.f32 %v1012, %v1032
        %v1099 = vadd.f32 %v1013, %v1036
        %v1100 = vadd.f32 %v1014, %v1040
        %v1101 = vadd.f32 %v1015, %v1028
        %v1102 = vadd.f32 %v1016, %v1032
        %v1103 = vadd.f32 %v1017, %v1036
        %v1104 = vadd.f32 %v1018, %v1040
        %v1105 = vadd.f32 %v1019, %v1028
        %v1106 = vadd.f32 %v1020, %v1032
        %v1107 = vadd.f32 %v1021, %v1036
        %v1108 = vadd.f32 %v1022, %v1040
        %v1109 = vmax.f32 %v1045, 0.0
        %v1110 = vmax.f32 %v1046, 0.0
        %v1111 = vmax.f32 %v1047, 0.0
        %v1112 = vmax.f32 %v1048, 0.0
        %v1113 = vmax.f32 %v1049, 0.0
        %v1114 = vmax.f32 %v1050, 0.0
        %v1115 = vmax.f32 %v1051, 0.0
        %v1116 = vmax.f32 %v1052, 0.0
        %v1117 = vmax.f32 %v1053, 0.0
        %v1118 = vmax.f32 %v1054, 0.0
        %v1119 = vmax.f32 %v1055, 0.0
        %v1120 = vmax.f32 %v1056, 0.0
        %v1121 = vmax.f32 %v1057, 0.0
        %v1122 = vmax.f32 %v1058, 0.0
        %v1123 = vmax.f32 %v1059, 0.0
        %v1124 = vmax.f32 %v1060, 0.0
        %v1125 = vmax.f32 %v1061, 0.0
        %v1126 = vmax.f32 %v1062, 0.0
        %v1127 = vmax.f32 %v1063, 0.0
        %v1128 = vmax.f32 %v1064, 0.0
        %v1129 = vmax.f32 %v1065, 0.0
        %v1130 = vmax.f32 %v1066, 0.0
        %v1131 = vmax.f32 %v1067, 0.0
        %v1132 = vmax.f32 %v1068, 0.0
        %v1133 = vmax.f32 %v1069, 0.0
        %v1134 = vmax.f32 %v1070, 0.0
        %v1135 = vmax.f32 %v1071, 0.0
        %v1136 = vmax.f32 %v1072, 0.0
        %v1137 = vmax.f32 %v1073, 0.0
        %v1138 = vmax.f32 %v1074, 0.0
        %v1139 = vmax.f32 %v1075, 0.0
        %v1140 = vmax.f32 %v1076, 0.0
        %v1141 = vmax.f32 %v1077, 0.0
        %v1142 = vmax.f32 %v1078, 0.0
        %v1143 = vmax.f32 %v1079, 0.0
        %v1144 = vmax.f32 %v1080, 0.0
        %v1145 = vmax.f32 %v1081, 0.0
        %v1146 = vmax.f32 %v1082, 0.0
        %v1147 = vmax.f32 %v1083, 0.0
        %v1148 = vmax.f32 %v1084, 0.0
        %v1149 = vmax.f32 %v1085, 0.0
        %v1150 = vmax.f32 %v1086, 0.0
        %v1151 = vmax.f32 %v1087, 0.0
        %v1152 = vmax.f32 %v1088, 0.0
        %v1153 = vmax.f32 %v1089, 0.0
        %v1154 = vmax.f32 %v1090, 0.0
        %v1155 = vmax.f32 %v1091, 0.0
        %v1156 = vmax.f32 %v1092, 0.0
        %v1157 = vmax.f32 %v1093, 0.0
        %v1158 = vmax.f32 %v1094, 0.0
        %v1159 = vmax.f32 %v1095, 0.0
        %v1160 = vmax.f32 %v1096, 0.0
        %v1161 = vmax.f32 %v1097, 0.0
        %v1162 = vmax.f32 %v1098, 0.0
        %v1163 = vmax.f32 %v1099, 0.0
        %v1164 = vmax.f32 %v1100, 0.0
        %v1165 = vmax.f32 %v1101, 0.0
        %v1166 = vmax.f32 %v1102, 0.0
        %v1167 = vmax.f32 %v1103, 0.0
        %v1168 = vmax.f32 %v1104, 0.0
        %v1169 = vmax.f32 %v1105, 0.0
        %v1170 = vmax.f32 %v1106, 0.0
        %v1171 = vmax.f32 %v1107, 0.0
        %v1172 = vmax.f32 %v1108, 0.0
        %v1173 = vadd.f32 %v1109, %v1111
        %v1174 = vadd.f32 %v1110, %v1112
        %v1175 = vadd.f32 %v1113, %v1115
        %v1176 = vadd.f32 %v1114, %v1116
        %v1177 = vadd.f32 %v1117, %v1119
        %v1178 = vadd.f32 %v1118, %v1120
        %v1179 = vadd.f32 %v1121, %v1123
        %v1180 = vadd.f32 %v1122, %v1124
        %v1181 = vadd.f32 %v1125, %v1127
        %v1182 = vadd.f32 %v1126, %v1128
        %v1183 = vadd.f32 %v1129, %v1131
        %v1184 = vadd.f32 %v1130, %v1132
        %v1185 = vadd.f32 %v1133, %v1135
        %v1186 = vadd.f32 %v1134, %v1136
        %v1187 = vadd.f32 %v1137, %v1139
        %v1188 = vadd.f32 %v1138, %v1140
        %v1189 = vadd.f32 %v1141, %v1143
        %v1190 = vadd.f32 %v1142, %v1144
        %v1191 = vadd.f32 %v1145, %v1147
        %v1192 = vadd.f32 %v1146, %v1148
        %v1193 = vadd.f32 %v1149, %v1151
        %v1194 = vadd.f32 %v1150, %v1152
        %v1195 = vadd.f32 %v1153, %v1155
        %v1196 = vadd.f32 %v1154, %v1156
        %v1197 = vadd.f32 %v1157, %v1159
        %v1198 = vadd.f32 %v1158, %v1160
        %v1199 = vadd.f32 %v1161, %v1163
        %v1200 = vadd.f32 %v1162, %v1164
        %v1201 = vadd.f32 %v1165, %v1167
        %v1202 = vadd.f32 %v1166, %v1168
        %v1203 = vadd.f32 %v1169, %v1171
        %v1204 = vadd.f32 %v1170, %v1172
        %v1205 = vadd.f32 %v1173, %v1174
        %v1206 = vadd.f32 %v1175, %v1176
        %v1207 = vadd.f32 %v1177, %v1178
        %v1208 = vadd.f32 %v1179, %v1180
        %v1209 = vadd.f32 %v1181, %v1182
        %v1210 = vadd.f32 %v1183, %v1184
        %v1211 = vadd.f32 %v1185, %v1186
        %v1212 = vadd.f32 %v1187, %v1188
        %v1213 = vadd.f32 %v1189, %v1190
        %v1214 = vadd.f32 %v1191, %v1192
        %v1215 = vadd.f32 %v1193, %v1194
        %v1216 = vadd.f32 %v1195, %v1196
        %v1217 = vadd.f32 %v1197, %v1198
        %v1218 = vadd.f32 %v1199, %v1200
        %v1219 = vadd.f32 %v1201, %v1202
        %v1220 = vadd.f32 %v1203, %v1204
        %1221 = vrot.lane.b32.xlu0 %v1205, 64
        %v1222 = vpop.permute.xlu0 %1221
        %1223 = vrot.lane.b32.xlu0 %v1206, 64
        %v1224 = vpop.permute.xlu0 %1223
        %1225 = vrot.lane.b32.xlu0 %v1207, 64
        %v1226 = vpop.permute.xlu0 %1225
        %1227 = vrot.lane.b32.xlu0 %v1208, 64
        %v1228 = vpop.permute.xlu0 %1227
        %1229 = vrot.lane.b32.xlu0 %v1209, 64
        %v1230 = vpop.permute.xlu0 %1229
        %1231 = vrot.lane.b32.xlu0 %v1210, 64
        %v1232 = vpop.permute.xlu0 %1231
        %1233 = vrot.lane.b32.xlu0 %v1211, 64
        %v1234 = vpop.permute.xlu0 %1233
        %1235 = vrot.lane.b32.xlu0 %v1212, 64
        %v1236 = vpop.permute.xlu0 %1235
        %1237 = vrot.lane.b32.xlu0 %v1213, 64
        %v1238 = vpop.permute.xlu0 %1237
        %1239 = vrot.lane.b32.xlu0 %v1214, 64
        %v1240 = vpop.permute.xlu0 %1239
        %1241 = vrot.lane.b32.xlu0 %v1215, 64
        %v1242 = vpop.permute.xlu0 %1241
        %1243 = vrot.lane.b32.xlu0 %v1216, 64
        %v1244 = vpop.permute.xlu0 %1243
        %1245 = vrot.lane.b32.xlu0 %v1217, 64
        %v1246 = vpop.permute.xlu0 %1245
        %1247 = vrot.lane.b32.xlu0 %v1218, 64
        %v1248 = vpop.permute.xlu0 %1247
        %1249 = vrot.lane.b32.xlu0 %v1219, 64
        %v1250 = vpop.permute.xlu0 %1249
        %1251 = vrot.lane.b32.xlu0 %v1220, 64
        %v1252 = vpop.permute.xlu0 %1251
        %v1253 = vlaneseq
        %v1254 = vand.u32 %v1253, 127
        %v1255 = vadd.f32 %v1205, %v1222
        %v1256 = vadd.f32 %v1206, %v1224
        %v1257 = vadd.f32 %v1207, %v1226
        %v1258 = vadd.f32 %v1208, %v1228
        %v1259 = vadd.f32 %v1209, %v1230
        %v1260 = vadd.f32 %v1210, %v1232
        %v1261 = vadd.f32 %v1211, %v1234
        %v1262 = vadd.f32 %v1212, %v1236
        %v1263 = vadd.f32 %v1213, %v1238
        %v1264 = vadd.f32 %v1214, %v1240
        %v1265 = vadd.f32 %v1215, %v1242
        %v1266 = vadd.f32 %v1216, %v1244
        %v1267 = vadd.f32 %v1217, %v1246
        %v1268 = vadd.f32 %v1218, %v1248
        %v1269 = vadd.f32 %v1219, %v1250
        %v1270 = vadd.f32 %v1220, %v1252
        %1271 = vrot.lane.b32.xlu0 %v1255, 96
        %v1272 = vpop.permute.xlu0 %1271
        %1273 = vrot.lane.b32.xlu0 %v1256, 96
        %v1274 = vpop.permute.xlu0 %1273
        %1275 = vrot.lane.b32.xlu0 %v1257, 96
        %v1276 = vpop.permute.xlu0 %1275
        %1277 = vrot.lane.b32.xlu0 %v1258, 96
        %v1278 = vpop.permute.xlu0 %1277
        %1279 = vrot.lane.b32.xlu0 %v1259, 96
        %v1280 = vpop.permute.xlu0 %1279
        %1281 = vrot.lane.b32.xlu0 %v1260, 96
        %v1282 = vpop.permute.xlu0 %1281
        %1283 = vrot.lane.b32.xlu0 %v1261, 96
        %v1284 = vpop.permute.xlu0 %1283
        %1285 = vrot.lane.b32.xlu0 %v1262, 96
        %v1286 = vpop.permute.xlu0 %1285
        %1287 = vrot.lane.b32.xlu0 %v1263, 96
        %v1288 = vpop.permute.xlu0 %1287
        %1289 = vrot.lane.b32.xlu0 %v1264, 96
        %v1290 = vpop.permute.xlu0 %1289
        %1291 = vrot.lane.b32.xlu0 %v1265, 96
        %v1292 = vpop.permute.xlu0 %1291
        %1293 = vrot.lane.b32.xlu0 %v1266, 96
        %v1294 = vpop.permute.xlu0 %1293
        %1295 = vrot.lane.b32.xlu0 %v1267, 96
        %v1296 = vpop.permute.xlu0 %1295
        %1297 = vrot.lane.b32.xlu0 %v1268, 96
        %v1298 = vpop.permute.xlu0 %1297
        %1299 = vrot.lane.b32.xlu0 %v1269, 96
        %v1300 = vpop.permute.xlu0 %1299
        %1301 = vrot.lane.b32.xlu0 %v1270, 96
        %v1302 = vpop.permute.xlu0 %1301
        %v1303 = vadd.f32 %v1255, %v1272
        %v1304 = vadd.f32 %v1256, %v1274
        %v1305 = vadd.f32 %v1257, %v1276
        %v1306 = vadd.f32 %v1258, %v1278
        %v1307 = vadd.f32 %v1259, %v1280
        %v1308 = vadd.f32 %v1260, %v1282
        %v1309 = vadd.f32 %v1261, %v1284
        %v1310 = vadd.f32 %v1262, %v1286
        %v1311 = vadd.f32 %v1263, %v1288
        %v1312 = vadd.f32 %v1264, %v1290
        %v1313 = vadd.f32 %v1265, %v1292
        %v1314 = vadd.f32 %v1266, %v1294
        %v1315 = vadd.f32 %v1267, %v1296
        %v1316 = vadd.f32 %v1268, %v1298
        %v1317 = vadd.f32 %v1269, %v1300
        %v1318 = vadd.f32 %v1270, %v1302
        %v1319 = vmul.f32 %v1303, 0.0625
        %v1320 = vmul.f32 %v1304, 0.0625
        %v1321 = vmul.f32 %v1305, 0.0625
        %v1322 = vmul.f32 %v1306, 0.0625
        %v1323 = vmul.f32 %v1307, 0.0625
        %v1324 = vmul.f32 %v1308, 0.0625
        %v1325 = vmul.f32 %v1309, 0.0625
        %v1326 = vmul.f32 %v1310, 0.0625
        %v1327 = vmul.f32 %v1311, 0.0625
        %v1328 = vmul.f32 %v1312, 0.0625
        %v1329 = vmul.f32 %v1313, 0.0625
        %v1330 = vmul.f32 %v1314, 0.0625
        %v1331 = vmul.f32 %v1315, 0.0625
        %v1332 = vmul.f32 %v1316, 0.0625
        %v1333 = vmul.f32 %v1317, 0.0625
        %v1334 = vmul.f32 %v1318, 0.0625
        %vm1335 = vcmask 261120
        %v1336 = vsel %vm1335, %v1319, 0.0
        %v1337 = vsel %vm1335, %v1320, 0.0
        %v1338 = vadd.f32 %v1336, %v1337
        %v1339 = vrot.slane %v1338, 4
        %v1340 = vadd.f32 %v1338, %v1339
        %v1341 = vrot.slane %v1340, 2
        %v1342 = vadd.f32 %v1340, %v1341
        %v1343 = vrot.slane %v1342, 1
        %v1344 = vadd.f32 %v1342, %v1343
        %v1345 = vsel %vm1335, %v1321, 0.0
        %v1346 = vsel %vm1335, %v1322, 0.0
        %v1347 = vadd.f32 %v1345, %v1346
        %v1348 = vrot.slane %v1347, 4
        %v1349 = vadd.f32 %v1347, %v1348
        %v1350 = vrot.slane %v1349, 2
        %v1351 = vadd.f32 %v1349, %v1350
        %v1352 = vrot.slane %v1351, 1
        %v1353 = vadd.f32 %v1351, %v1352
        %v1354 = vsel %vm1335, %v1323, 0.0
        %v1355 = vsel %vm1335, %v1324, 0.0
        %v1356 = vadd.f32 %v1354, %v1355
        %v1357 = vrot.slane %v1356, 4
        %v1358 = vadd.f32 %v1356, %v1357
        %v1359 = vrot.slane %v1358, 2
        %v1360 = vadd.f32 %v1358, %v1359
        %v1361 = vrot.slane %v1360, 1
        %v1362 = vadd.f32 %v1360, %v1361
        %v1363 = vsel %vm1335, %v1325, 0.0
        %v1364 = vsel %vm1335, %v1326, 0.0
        %v1365 = vadd.f32 %v1363, %v1364
        %v1366 = vrot.slane %v1365, 4
        %v1367 = vadd.f32 %v1365, %v1366
        %v1368 = vrot.slane %v1367, 2
        %v1369 = vadd.f32 %v1367, %v1368
        %v1370 = vrot.slane %v1369, 1
        %v1371 = vadd.f32 %v1369, %v1370
        %v1372 = vsel %vm1335, %v1327, 0.0
        %v1373 = vsel %vm1335, %v1328, 0.0
        %v1374 = vadd.f32 %v1372, %v1373
        %v1375 = vrot.slane %v1374, 4
        %v1376 = vadd.f32 %v1374, %v1375
        %v1377 = vrot.slane %v1376, 2
        %v1378 = vadd.f32 %v1376, %v1377
        %v1379 = vrot.slane %v1378, 1
        %v1380 = vadd.f32 %v1378, %v1379
        %v1381 = vsel %vm1335, %v1329, 0.0
        %v1382 = vsel %vm1335, %v1330, 0.0
        %v1383 = vadd.f32 %v1381, %v1382
        %v1384 = vrot.slane %v1383, 4
        %v1385 = vadd.f32 %v1383, %v1384
        %v1386 = vrot.slane %v1385, 2
        %v1387 = vadd.f32 %v1385, %v1386
        %v1388 = vrot.slane %v1387, 1
        %v1389 = vadd.f32 %v1387, %v1388
        %v1390 = vsel %vm1335, %v1331, 0.0
        %v1391 = vsel %vm1335, %v1332, 0.0
        %v1392 = vadd.f32 %v1390, %v1391
        %v1393 = vrot.slane %v1392, 4
        %v1394 = vadd.f32 %v1392, %v1393
        %v1395 = vrot.slane %v1394, 2
        %v1396 = vadd.f32 %v1394, %v1395
        %v1397 = vrot.slane %v1396, 1
        %v1398 = vadd.f32 %v1396, %v1397
        %v1399 = vsel %vm1335, %v1333, 0.0
        %v1400 = vsel %vm1335, %v1334, 0.0
        %v1401 = vadd.f32 %v1399, %v1400
        %v1402 = vrot.slane %v1401, 4
        %v1403 = vadd.f32 %v1401, %v1402
        %v1404 = vrot.slane %v1403, 2
        %v1405 = vadd.f32 %v1403, %v1404
        %v1406 = vrot.slane %v1405, 1
        %v1407 = vadd.f32 %v1405, %v1406
        %v1408 = vrcp.pop 16.0
        %v1409 = vmul.f32 %v1344, %v1408
        %v1410 = vmul.f32 %v1353, %v1408
        %v1411 = vmul.f32 %v1362, %v1408
        %v1412 = vmul.f32 %v1371, %v1408
        %v1413 = vmul.f32 %v1380, %v1408
        %v1414 = vmul.f32 %v1389, %v1408
        %v1415 = vmul.f32 %v1398, %v1408
        %v1416 = vmul.f32 %v1407, %v1408
        %v1417 = vlaneseq
        %v1418 = vshrl.u32 %v1417, 7
        %vm1419 = vcmp.lt.s32.totalorder %v1418, 0
        %v1420 = vsub.s32 0, %v1418
        %v1421 = vsel %vm1419, %v1420, %v1418
        %v1422 = vshrl.u32 %v1421, 3
        %v1423 = vand.u32 %v1421, 7
        %v1424 = vsub.s32 0, %v1423
        %v1425 = vsel %vm1419, %v1424, %v1423
        %vm1426 = vcmp.ne.s32.totalorder %v1425, 0
        %vm1427 = vcmp.lt.s32.totalorder %v1425, 0
        %vm1428 = vmand %vm1427, %vm1426
        %v1429 = vadd.s32 %v1425, 8
        %v1430 = vsel %vm1428, %v1429, %v1425
        %vm1439 = vcmask 1041409
        %v1440 = vsel %vm1439, %v1410, %v1409
        %vm1441 = vcmask 1042434
        %v1442 = vsel %vm1441, %v1411, %v1440
        %vm1443 = vcmask 1043459
        %v1444 = vsel %vm1443, %v1412, %v1442
        %vm1445 = vcmask 1044484
        %v1446 = vsel %vm1445, %v1413, %v1444
        %vm1447 = vcmask 1045509
        %v1448 = vsel %vm1447, %v1414, %v1446
        %vm1449 = vcmask 1046534
        %v1450 = vsel %vm1449, %v1415, %v1448
        %vm1451 = vcmask 1047559
        %v1452 = vsel %vm1451, %v1416, %v1450
        %v1454 = vrot.slane %v1452, 7
        %v1455 = vadd.s32 %v1430, 4294967295
        %vm1456 = vcmp.ge.s32.totalorder %v1455, 0
        %vm1457 = vcmp.le.s32.totalorder %v1455, 7
        %vm1458 = vmand %vm1456, %vm1457
        %v1459 = vsel %vm1458, %v1454, 0.0
        %v1460 = vrot.slane %v1452, 1
        %v1461 = vadd.s32 %v1430, 1
        %vm1462 = vcmp.ge.s32.totalorder %v1461, 0
        %vm1463 = vcmp.le.s32.totalorder %v1461, 7
        %vm1464 = vmand %vm1462, %vm1463
        %v1465 = vsel %vm1464, %v1460, 0.0
        %1466 = vrot.lane.b32.xlu0 %v1452, 32
        %v1467 = vpop.permute.xlu0 %1466
        %1470 = vrot.lane.b32.xlu0 %v1465, 64
        %v1471 = vpop.permute.xlu0 %1470
        %v1473 = vsel %vm1335, %v1459, %v1467
        %vm1474 = vcmask 523264
        %v1475 = vsel %vm1474, %v1473, %v1471
        %v1476 = vld [vmem:[%s4] sm:$0xff]
        %v1477 = vld [vmem:[%s4 + $0x8] sm:$0xff]
        %v1478 = vld [vmem:[%s4 + $0x10] sm:$0xff]
        %v1479 = vld [vmem:[%s4 + $0x18] sm:$0xff]
        %v1480 = vld [vmem:[%s4 + $0x20] sm:$0xff]
        %v1481 = vld [vmem:[%s4 + $0x28] sm:$0xff]
        %v1482 = vld [vmem:[%s4 + $0x30] sm:$0xff]
        %v1483 = vld [vmem:[%s4 + $0x38] sm:$0xff]
        %v1484 = vld [vmem:[%s4 + $0x40] sm:$0xff]
        %v1485 = vld [vmem:[%s4 + $0x48] sm:$0xff]
        %v1486 = vld [vmem:[%s4 + $0x50] sm:$0xff]
        %v1487 = vld [vmem:[%s4 + $0x58] sm:$0xff]
        %vm1488 = vcmask 785408
        %v1490 = vsel %vm1488, %v1475, 0
        %1492 = vmatprep.subr.mxu0 0.0
        %1493 = vmatpush1.msra.mxu0 0.0
        %1494 = vmatprep.subr.mxu0 0.0
        %1495 = vmatpush1.msra.mxu0 0.0
        %1496 = vmatprep.subr.mxu0 0.0
        %1497 = vmatpush1.msra.mxu0 0.0
        %1498 = vmatprep.subr.mxu0 0.0
        %1499 = vmatpush1.msra.mxu0 0.0
        %1500 = vmatprep.subr.mxu0 0.0
        %1501 = vmatpush1.msra.mxu0 %v1487
        %1502 = vmatprep.subr.mxu0 0.0
        %1503 = vmatpush1.msra.mxu0 %v1486
        %1504 = vmatprep.subr.mxu0 0.0
        %1505 = vmatpush1.msra.mxu0 %v1485
        %1506 = vmatprep.subr.mxu0 0.0
        %1507 = vmatpush1.msra.mxu0 %v1484
        %1508 = vmatprep.subr.mxu0 0.0
        %1509 = vmatpush1.msra.mxu0 %v1483
        %1510 = vmatprep.subr.mxu0 0.0
        %1511 = vmatpush1.msra.mxu0 %v1482
        %1512 = vmatprep.subr.mxu0 0.0
        %1513 = vmatpush1.msra.mxu0 %v1481
        %1514 = vmatprep.subr.mxu0 0.0
        %1515 = vmatpush1.msra.mxu0 %v1480
        %1516 = vmatprep.subr.mxu0 0.0
        %1517 = vmatpush1.msra.mxu0 %v1479
        %1518 = vmatprep.subr.mxu0 0.0
        %1519 = vmatpush1.msra.mxu0 %v1478
        %1520 = vmatprep.subr.mxu0 0.0
        %1521 = vmatpush1.msra.mxu0 %v1477
        %1522 = vmatprep.subr.mxu0 0.0
        %1523 = vmatpush1.msra.mxu0 %v1476
        %1524 = vmatprep.subr.mxu0 0.0
        %1525 = vmatpush2.msra.mxu0 0.0
        %1526 = vmatprep.subr.mxu0 0.0
        %1527 = vmatpush2.msra.mxu0 0.0
        %1528 = vmatprep.subr.mxu0 0.0
        %1529 = vmatpush2.msra.mxu0 0.0
        %1530 = vmatprep.subr.mxu0 0.0
        %1531 = vmatpush2.msra.mxu0 0.0
        %1532 = vmatprep.subr.mxu0 0.0
        %1533 = vmatpush2.msra.mxu0 0.0
        %1534 = vmatprep.subr.mxu0 0.0
        %1535 = vmatpush2.msra.mxu0 0.0
        %1536 = vmatprep.subr.mxu0 0.0
        %1537 = vmatpush2.msra.mxu0 0.0
        %1538 = vmatprep.subr.mxu0 0.0
        %1539 = vmatpush2.msra.mxu0 0.0
        %1540 = vmatprep.subr.mxu0 0.0
        %1541 = vmatpush2.msra.mxu0 0.0
        %1542 = vmatprep.subr.mxu0 0.0
        %1543 = vmatpush2.msra.mxu0 0.0
        %1544 = vmatprep.subr.mxu0 0.0
        %1545 = vmatpush2.msra.mxu0 0.0
        %1546 = vmatprep.subr.mxu0 0.0
        %1547 = vmatpush2.msra.mxu0 0.0
        %1548 = vmatprep.subr.mxu0 0.0
        %1549 = vmatpush2.msra.mxu0 0.0
        %1550 = vmatprep.subr.mxu0 0.0
        %1551 = vmatpush2.msra.mxu0 0.0
        %1552 = vmatprep.subr.mxu0 0.0
        %1553 = vmatpush2.msra.mxu0 0.0
        %1554 = vmatprep.subr.mxu0 0.0
        %1555 = vmatpush2.msra.mxu0 0.0
        %1556 = vmatprep.mubr.f32.mxu0 0.0
        %1557 = vmatmul.mubr.f32.gmra.mxu0 %v1490
        %v1558 = vpop.f32.mrf.mxu0
        %v1559 = vadd.f32 0.0, %v1558
        %v1560 = vpop.f32.mrf.mxu0
        %1561 = vdwg.mxu0
        %1562 = vst.msk [vmem:[%s258] sm:$0xff] %vm1335, %v1559
        %s1563 = sand.u32 %s141, 1
        %s1564 = scalar_lea.sflag [#allocation4], %s1563
        %s1565 = sand.u32 %s141, 1
        %s1566 = smul.addr %s1565, 8
        %s1567 = scalar_lea.vmem [#allocation7], %s1566
        // Predicated region
        $region49: #{tpu_custom_call.1} parent=39 // pred_check
          %p1568 = pneg %p151
        $region50: #{tpu_custom_call.1} parent=39 // pred_check_branch
          %1570 = sbr.rel (%p1568) target = $region52
        $region51: #{tpu_custom_call.1} parent=39 // pred_region
          %s1572 = ssub.s32 128, 128
          %1573 = vsyncadd %s1564, %s1572
          %s1574 = smul.addr %s23, 128
          %s1575 = scalar_lea.hbm %s5, %s1574
          %s1577 = sshll.u32 %s1567, 4
          %s1578 = int_to_ptr.vmem [resolvable:$true] %s1577
          %1580 = dma.vmem_to_hbm [thread:$0]  %s1578, 128, %s1575, %s1564
        $region52: #{tpu_custom_call.1} parent=39 // pred_fallthru
          _
      $region40: #{tpu_custom_call.1} parent=5 // pred_fallthru
        _
      %p1581 = scmp.le.s32.totalorder 2, %s18
      // Predicated region
      $region53: #{tpu_custom_call.1} parent=5 // pred_check
        %p1582 = pneg %p1581
      $region54: #{tpu_custom_call.1} parent=5 // pred_check_branch
        %1584 = sbr.rel (%p1582) target = $region56
      $region55: #{tpu_custom_call.1} parent=5 // pred_region
        %s1585 = ssub.s32 %s18, 2
        // Predicated region
        $region57: #{tpu_custom_call.1} parent=55 // pred_check
          %p1586 = pneg %p157
        $region58: #{tpu_custom_call.1} parent=55 // pred_check_branch
          %1588 = sbr.rel (%p1586) target = $region60
        $region59: #{tpu_custom_call.1} parent=55 // pred_region
          %s1589 = sand.u32 %s142, 1
          %s1590 = scalar_lea.sflag [#allocation4], %s1589
          %s1591 = sand.u32 %s142, 1
          %s1592 = smul.addr %s1591, 8
          %s1593 = scalar_lea.vmem [#allocation7], %s1592
          %1594 = dma.done %s1590, 128
        $region60: #{tpu_custom_call.1} parent=55 // pred_fallthru
          _
      $region56: #{tpu_custom_call.1} parent=5 // pred_fallthru
        _
    $region6: #{tpu_custom_call.1} parent=1 // loop_footer
      %s22 = sadd.s32 1, %s18
    $region7: #{tpu_custom_call.1} parent=1 // loop_footer_branch
      %17 = sbr.rel target = $region3
    $region8: #{tpu_custom_call.1} parent=1 // loop_exit
      _
    %1595 = vsyncpa [#allocation3], 1
    %s1596 = scalar_lea.sflag [#allocation3], 1
    %1597 = vsyncpa %s1596, 1
    %1598 = vsyncpa [#allocation6], 1
    %1599 = vsyncpa [#allocation4], 1
    %s1600 = scalar_lea.sflag [#allocation4], 1
    %1601 = vsyncpa %s1600, 1

</llo_original>
